<compile_context>
chip_gen: v7x
topology: tpu7x:2x2x1
jax: 0.10.0
libtpu: 0.0.40
codegen_flags: <defaults>
</compile_context>

<pallas_src>
import jax
import jax.numpy as jnp
from jax import lax
from jax.experimental import pallas as pl
from jax.experimental.pallas import tpu as pltpu


_LP = 8  # left column pad of the halo scratches (sublane-aligned interior)


def _classifier_kernel(xm_ref, xt_ref, xb_ref,
                       dw1_ref, db1_ref, pw1_ref, pb1_ref,
                       dw2_ref, db2_ref, pw2_ref, pb2_ref,
                       wc_ref, bc_ref,
                       out_ref,
                       xpad_ref, f1pad_ref):
    # xm_ref  : (1, TH, W, C)  bf16   main row tile (rows r*TH .. r*TH+TH-1)
    # xt_ref  : (1, 2,  W, C)  bf16   2 rows above the window (clamped at r==0)
    # xb_ref  : (1, 2,  W, C)  bf16   2 rows below the window (clamped at last)
    # dw*_ref : (3, 3, C)  f32        folded depthwise weights
    # db*_ref : (1, C)     f32        folded depthwise biases
    # pw*_ref : (C, C)     bf16       folded 1x1 weights (C_in, C_out)
    # pb*_ref : (1, C)     f32        folded 1x1 biases
    # wc_ref  : (NC, C)    bf16       classifier 1x1 weight
    # bc_ref  : (NC, 1)    f32        classifier bias
    # out_ref : (1, NC, TH*W) f32     logits, channels-major, lane-dense
    # xpad_ref : (TH+4, Wp, C) f32    conv1 input window (+/-2 rows, col halo)
    # f1pad_ref: (TH+2, Wp, C) f32    DepthSepConv1 output (+/-1 rows, col halo)
    TH, W, C = xm_ref.shape[1], xm_ref.shape[2], xm_ref.shape[3]
    LP = _LP
    r = pl.program_id(1)
    last_r = pl.num_programs(1) - 1

    # ---- assemble the conv1 input window (global rows r*TH-2 .. r*TH+TH+1,
    # zeros outside the image).  Only columns LP-1 and LP+W of the column halo
    # are ever read, so only those are zeroed (every step: megacore-safe).
    xpad_ref[:, LP - 1:LP, :] = jnp.zeros((TH + 4, 1, C), jnp.float32)
    xpad_ref[:, LP + W:LP + W + 1, :] = jnp.zeros((TH + 4, 1, C), jnp.float32)
    xpad_ref[2:TH + 2, LP:LP + W, :] = xm_ref[0].astype(jnp.float32)
    top_mask = (r > 0).astype(jnp.float32)           # zero halo at image top
    xpad_ref[0:2, LP:LP + W, :] = xt_ref[0].astype(jnp.float32) * top_mask
    bot_mask = (r < last_r).astype(jnp.float32)      # zero halo at image bottom
    xpad_ref[TH + 2:TH + 4, LP:LP + W, :] = xb_ref[0].astype(jnp.float32) * bot_mask

    def depthwise_relu(src_ref, nrows, dw3, dbias):
        # 3x3 depthwise conv (stride 1, padding baked into the halo) + folded
        # BN + ReLU.  dx is hoisted: 3 sublane-shifted ref loads; the dy slice
        # of the loaded value is major-dim addressing only (no VMEM copy).
        acc = None
        for dx in range(3):
            col = src_ref[:, LP - 1 + dx:LP - 1 + dx + W, :]   # (nrows+2, W, C)
            for dy in range(3):
                tap = col[dy:dy + nrows] * dw3[dy, dx].reshape(1, 1, C)
                acc = tap if acc is None else acc + tap
        return jnp.maximum(acc + dbias.reshape(1, 1, C), 0.0)

    # ---- DepthSepConv1 over TH+2 rows (halo recompute for conv2) ----
    d1 = depthwise_relu(xpad_ref, TH + 2, dw1_ref[...], db1_ref[...])
    f1 = jnp.dot(d1.reshape((TH + 2) * W, C).astype(jnp.bfloat16), pw1_ref[...],
                 preferred_element_type=jnp.float32) + pb1_ref[...]
    f1 = jnp.maximum(f1, 0.0).reshape(TH + 2, W, C)

    f1pad_ref[:, LP - 1:LP, :] = jnp.zeros((TH + 2, 1, C), jnp.float32)
    f1pad_ref[:, LP + W:LP + W + 1, :] = jnp.zeros((TH + 2, 1, C), jnp.float32)
    f1pad_ref[:, LP:LP + W, :] = f1

    # conv2's zero padding at the image top / bottom boundary rows.
    @pl.when(r == 0)
    def _():
        f1pad_ref[0:1, LP:LP + W, :] = jnp.zeros((1, W, C), jnp.float32)

    @pl.when(r == last_r)
    def _():
        f1pad_ref[TH + 1:TH + 2, LP:LP + W, :] = jnp.zeros((1, W, C), jnp.float32)

    # ---- DepthSepConv2 over the TH output rows ----
    d2 = depthwise_relu(f1pad_ref, TH, dw2_ref[...], db2_ref[...])
    f2 = jnp.dot(d2.reshape(TH * W, C).astype(jnp.bfloat16), pw2_ref[...],
                 preferred_element_type=jnp.float32) + pb2_ref[...]
    f2 = jnp.maximum(f2, 0.0)                                   # (TH*W, C)

    # Dropout(0.1) is identity in eval mode.
    # Final 1x1 classifier conv, channels-major so the output store is
    # lane-dense; contraction is on the last axes of both operands so only the
    # MXU feed of the small (NC, C) weight / activation is rearranged.
    logits = lax.dot_general(wc_ref[...], f2.astype(jnp.bfloat16),
                             (((1,), (1,)), ((), ())),
                             preferred_element_type=jnp.float32)
    out_ref[0] = (logits + bc_ref[...]).astype(out_ref.dtype)


def _bn_fold(gamma, beta, mean, var, eps=1e-5):
    scale = gamma / jnp.sqrt(var + eps)
    return scale, beta - mean * scale


def classifier_forward(x_nchw, params, row_tile=8):
    """Eval-mode Classifer forward: x (N, C, H, W) -> logits (N, NC, H, W)."""
    N, C0, H, W = x_nchw.shape
    NC = params['cls_w'].shape[0]
    TH = min(row_tile, H)
    assert H % TH == 0 and TH % 2 == 0, "row_tile must be even and divide H"
    R = H // TH
    assert (TH * W) % 128 == 0 or R == 1, "row_tile*W should be a multiple of 128"

    # Pad channels to a multiple of 128 so the depthwise (VPU) stage uses all
    # 128 lanes; zero-padded channels stay exactly zero through every stage.
    C = ((C0 + 127) // 128) * 128
    Wp = _LP + W + 8                        # column-padded scratch width
    TH2 = TH // 2

    # NCHW -> NHWC + bf16 cast + channel pad: one fused XLA pass (see header
    # TODO about emitting NHWC bf16 upstream).
    x = jnp.transpose(x_nchw, (0, 2, 3, 1)).astype(jnp.bfloat16)
    if C != C0:
        x = jnp.pad(x, ((0, 0), (0, 0), (0, 0), (0, C - C0)))

    def fold_ds(idx):
        s_dw, b_dw = _bn_fold(params[f'bn_dw{idx}_g'], params[f'bn_dw{idx}_b'],
                              params[f'bn_dw{idx}_m'], params[f'bn_dw{idx}_v'])
        dw3 = jnp.transpose(params[f'dw{idx}_w'][:, 0] * s_dw[:, None, None],
                            (1, 2, 0))                                   # (3,3,C0)
        dw3 = jnp.pad(dw3, ((0, 0), (0, 0), (0, C - C0)))
        db = jnp.pad(b_dw, (0, C - C0)).reshape(1, C)
        s_pw, b_pw = _bn_fold(params[f'bn_pw{idx}_g'], params[f'bn_pw{idx}_b'],
                              params[f'bn_pw{idx}_m'], params[f'bn_pw{idx}_v'])
        pw = (params[f'pw{idx}_w'][:, :, 0, 0] * s_pw[:, None]).T         # (Cin,Cout)
        pw = jnp.pad(pw, ((0, C - C0), (0, C - C0))).astype(jnp.bfloat16)
        pb = jnp.pad(b_pw, (0, C - C0)).reshape(1, C)
        return dw3, db, pw, pb

    dw1, db1, pw1, pb1 = fold_ds(1)
    dw2, db2, pw2, pb2 = fold_ds(2)
    wc = jnp.pad(params['cls_w'][:, :, 0, 0],
                 ((0, 0), (0, C - C0))).astype(jnp.bfloat16)              # (NC, C)
    bc = params['cls_b'].reshape(NC, 1)

    out = pl.pallas_call(
        _classifier_kernel,
        out_shape=jax.ShapeDtypeStruct((N, NC, H * W), jnp.float32),
        grid=(N, R),
        in_specs=[
            # main row tile + the two 2-row halo windows (same array, clamped
            # block indices; out-of-image halos are zeroed inside the kernel)
            pl.BlockSpec((1, TH, W, C), lambda n, r: (n, r, 0, 0)),
            pl.BlockSpec((1, 2, W, C),
                         lambda n, r: (n, jnp.maximum(r * TH2 - 1, 0), 0, 0)),
            pl.BlockSpec((1, 2, W, C),
                         lambda n, r: (n, jnp.minimum((r + 1) * TH2, H // 2 - 1),
                                       0, 0)),
            pl.BlockSpec((3, 3, C), lambda n, r: (0, 0, 0)),
            pl.BlockSpec((1, C), lambda n, r: (0, 0)),
            pl.BlockSpec((C, C), lambda n, r: (0, 0)),
            pl.BlockSpec((1, C), lambda n, r: (0, 0)),
            pl.BlockSpec((3, 3, C), lambda n, r: (0, 0, 0)),
            pl.BlockSpec((1, C), lambda n, r: (0, 0)),
            pl.BlockSpec((C, C), lambda n, r: (0, 0)),
            pl.BlockSpec((1, C), lambda n, r: (0, 0)),
            pl.BlockSpec((NC, C), lambda n, r: (0, 0)),
            pl.BlockSpec((NC, 1), lambda n, r: (0, 0)),
        ],
        out_specs=pl.BlockSpec((1, NC, TH * W), lambda n, r: (n, 0, r)),
        scratch_shapes=[
            pltpu.VMEM((TH + 4, Wp, C), jnp.float32),
            pltpu.VMEM((TH + 2, Wp, C), jnp.float32),
        ],
        compiler_params=pltpu.CompilerParams(
            dimension_semantics=("parallel", "parallel"),
            # Row tiles are budgeted to fit comfortably inside v7x's 64 MiB
            # physical VMEM with double buffering.
            vmem_limit_bytes=64 * 1024 * 1024),
    )(x, x, x, dw1, db1, pw1, pb1, dw2, db2, pw2, pb2, wc, bc)

    return out.reshape(N, NC, H, W)


def _reference_nchw(x, params, eps=1e-5):
    """Plain-JAX reference (lax convs, eval-mode BN) for correctness check."""
    def bn(y, g, b, m, v):
        return ((y - m[None, :, None, None])
                / jnp.sqrt(v[None, :, None, None] + eps)
                * g[None, :, None, None] + b[None, :, None, None])

    def dsconv(y, idx):
        Cn = y.shape[1]
        y = lax.conv_general_dilated(y, params[f'dw{idx}_w'], (1, 1),
                                     ((1, 1), (1, 1)), feature_group_count=Cn,
                                     dimension_numbers=('NCHW', 'OIHW', 'NCHW'))
        y = jax.nn.relu(bn(y, params[f'bn_dw{idx}_g'], params[f'bn_dw{idx}_b'],
                           params[f'bn_dw{idx}_m'], params[f'bn_dw{idx}_v']))
        y = lax.conv_general_dilated(y, params[f'pw{idx}_w'], (1, 1),
                                     ((0, 0), (0, 0)),
                                     dimension_numbers=('NCHW', 'OIHW', 'NCHW'))
        y = jax.nn.relu(bn(y, params[f'bn_pw{idx}_g'], params[f'bn_pw{idx}_b'],
                           params[f'bn_pw{idx}_m'], params[f'bn_pw{idx}_v']))
        return y

    y = dsconv(x, 1)
    y = dsconv(y, 2)
    y = lax.conv_general_dilated(y, params['cls_w'], (1, 1), ((0, 0), (0, 0)),
                                 dimension_numbers=('NCHW', 'OIHW', 'NCHW'))
    return y + params['cls_b'][None, :, None, None]


def make_params(key, dw_channels, num_classes):
    C, NC = dw_channels, num_classes
    ks = iter(jax.random.split(key, 32))
    u = lambda shape: jax.random.uniform(next(ks), shape, jnp.float32, 0.5, 1.5)
    n = lambda shape: 0.1 * jax.random.normal(next(ks), shape, jnp.float32)
    p = {}
    for idx in (1, 2):
        p[f'dw{idx}_w'] = n((C, 1, 3, 3))
        p[f'bn_dw{idx}_g'] = u((C,)); p[f'bn_dw{idx}_b'] = n((C,))
        p[f'bn_dw{idx}_m'] = n((C,)); p[f'bn_dw{idx}_v'] = u((C,))
        p[f'pw{idx}_w'] = n((C, C, 1, 1))
        p[f'bn_pw{idx}_g'] = u((C,)); p[f'bn_pw{idx}_b'] = n((C,))
        p[f'bn_pw{idx}_m'] = n((C,)); p[f'bn_pw{idx}_v'] = u((C,))
    p['cls_w'] = n((NC, C, 1, 1))
    p['cls_b'] = n((NC,))
    return p


if __name__ == "__main__":
    N, C0, NC = 2, 32, 8
    H = W = 16

    key = jax.random.PRNGKey(0)
    k_x, k_p = jax.random.split(key)
    x = jax.random.normal(k_x, (N, C0, H, W), jnp.float32)
    params = make_params(k_p, C0, NC)

    # row_tile=8 -> 2 row tiles per batch item: exercises the halo / boundary
    # paths of the row-tiled pipeline at the test shape.
    out = classifier_forward(x, params, row_tile=8)
    out = jax.block_until_ready(out)

    # Reference on the bf16-rounded input (the kernel intentionally carries
    # activations as bf16 per the perf review); tolerance covers the bf16
    # matmul weights and intermediate casts (f32 accumulation throughout).
    x_q = x.astype(jnp.bfloat16).astype(jnp.float32)
    ref = _reference_nchw(x_q, params)

    assert out.shape == (N, NC, H, W)
    max_err = float(jnp.max(jnp.abs(out - ref)))
    assert jnp.allclose(out, ref, atol=5e-2, rtol=5e-2), \
        f"mismatch vs reference (max abs err {max_err})"

    print("KERNEL_OK")
</pallas_src>

<mosaic_0001>
module attributes {stable_mosaic.version = 11 : i64} {
  func.func @_classifier_kernel(%arg0: i32, %arg1: i32, %arg2: memref<1x8x16x128xbf16, #tpu.memory_space<vmem>>, %arg3: memref<1x2x16x128xbf16, #tpu.memory_space<vmem>>, %arg4: memref<1x2x16x128xbf16, #tpu.memory_space<vmem>>, %arg5: memref<3x3x128xf32, #tpu.memory_space<vmem>>, %arg6: memref<1x128xf32, #tpu.memory_space<vmem>>, %arg7: memref<128x128xbf16, #tpu.memory_space<vmem>>, %arg8: memref<1x128xf32, #tpu.memory_space<vmem>>, %arg9: memref<3x3x128xf32, #tpu.memory_space<vmem>>, %arg10: memref<1x128xf32, #tpu.memory_space<vmem>>, %arg11: memref<128x128xbf16, #tpu.memory_space<vmem>>, %arg12: memref<1x128xf32, #tpu.memory_space<vmem>>, %arg13: memref<8x128xbf16, #tpu.memory_space<vmem>>, %arg14: memref<8x1xf32, #tpu.memory_space<vmem>>, %arg15: memref<1x8x128xf32, #tpu.memory_space<vmem>>, %arg16: memref<12x32x128xf32, #tpu.memory_space<vmem>>, %arg17: memref<10x32x128xf32, #tpu.memory_space<vmem>>) attributes {dimension_semantics = [#tpu.dimension_semantics<parallel>, #tpu.dimension_semantics<parallel>], iteration_bounds = array<i64: 2, 2>, scalar_prefetch = 0 : i64, scratch_operands = 2 : i64, tpu.core_type = #tpu.core_type<tc>, window_params = [{transform_indices = @transform_0, window_bounds = array<i64: 1, 8, 16, 128>}, {transform_indices = @transform_1, window_bounds = array<i64: 1, 2, 16, 128>}, {transform_indices = @transform_2, window_bounds = array<i64: 1, 2, 16, 128>}, {pipeline_mode = #tpu.pipeline_mode<synchronous>, transform_indices = @transform_3, window_bounds = array<i64: 3, 3, 128>}, {pipeline_mode = #tpu.pipeline_mode<synchronous>, transform_indices = @transform_4, window_bounds = array<i64: 1, 128>}, {pipeline_mode = #tpu.pipeline_mode<synchronous>, transform_indices = @transform_5, window_bounds = array<i64: 128, 128>}, {pipeline_mode = #tpu.pipeline_mode<synchronous>, transform_indices = @transform_6, window_bounds = array<i64: 1, 128>}, {pipeline_mode = #tpu.pipeline_mode<synchronous>, transform_indices = @transform_7, window_bounds = array<i64: 3, 3, 128>}, {pipeline_mode = #tpu.pipeline_mode<synchronous>, transform_indices = @transform_8, window_bounds = array<i64: 1, 128>}, {pipeline_mode = #tpu.pipeline_mode<synchronous>, transform_indices = @transform_9, window_bounds = array<i64: 128, 128>}, {pipeline_mode = #tpu.pipeline_mode<synchronous>, transform_indices = @transform_10, window_bounds = array<i64: 1, 128>}, {pipeline_mode = #tpu.pipeline_mode<synchronous>, transform_indices = @transform_11, window_bounds = array<i64: 8, 128>}, {pipeline_mode = #tpu.pipeline_mode<synchronous>, transform_indices = @transform_12, window_bounds = array<i64: 8, 1>}, {transform_indices = @transform_13, window_bounds = array<i64: 1, 8, 128>}]} {
    %cst = arith.constant 0.000000e+00 : f32
    %0 = vector.broadcast %cst : f32 to vector<12x1x128xf32>
    %c0 = arith.constant 0 : index
    %c7 = arith.constant 7 : index
    %c0_0 = arith.constant 0 : index
    %1 = vector.load %arg16[%c0, %c7, %c0_0] : memref<12x32x128xf32, #tpu.memory_space<vmem>>, vector<12x1x128xf32>
    tpu.vector_store %arg16[%c0, %c7, %c0_0], %0 {strides = array<i32>} : memref<12x32x128xf32, #tpu.memory_space<vmem>>, vector<12x1x128xf32>,
    %cst_1 = arith.constant 0.000000e+00 : f32
    %2 = vector.broadcast %cst_1 : f32 to vector<12x1x128xf32>
    %c0_2 = arith.constant 0 : index
    %c24 = arith.constant 24 : index
    %c0_3 = arith.constant 0 : index
    %3 = vector.load %arg16[%c0_2, %c24, %c0_3] : memref<12x32x128xf32, #tpu.memory_space<vmem>>, vector<12x1x128xf32>
    tpu.vector_store %arg16[%c0_2, %c24, %c0_3], %2 {strides = array<i32>} : memref<12x32x128xf32, #tpu.memory_space<vmem>>, vector<12x1x128xf32>,
    %c0_4 = arith.constant 0 : index
    %c0_5 = arith.constant 0 : index
    %c0_6 = arith.constant 0 : index
    %c0_7 = arith.constant 0 : index
    %4 = vector.load %arg2[%c0_4, %c0_5, %c0_6, %c0_7] : memref<1x8x16x128xbf16, #tpu.memory_space<vmem>>, vector<1x8x16x128xbf16>
    %5 = vector.shape_cast %4 : vector<1x8x16x128xbf16> to vector<8x16x128xbf16>
    %6 = arith.extf %5 : vector<8x16x128xbf16> to vector<8x16x128xf32>
    %c2 = arith.constant 2 : index
    %c8 = arith.constant 8 : index
    %c0_8 = arith.constant 0 : index
    %7 = vector.load %arg16[%c2, %c8, %c0_8] : memref<12x32x128xf32, #tpu.memory_space<vmem>>, vector<8x16x128xf32>
    tpu.vector_store %arg16[%c2, %c8, %c0_8], %6 {strides = array<i32>} : memref<12x32x128xf32, #tpu.memory_space<vmem>>, vector<8x16x128xf32>,
    %c0_i32 = arith.constant 0 : i32
    %8 = arith.cmpi sgt, %arg1, %c0_i32 : i32
    %9 = arith.extui %8 : i1 to i32
    %10 = arith.sitofp %9 : i32 to f32
    %c0_9 = arith.constant 0 : index
    %c0_10 = arith.constant 0 : index
    %c0_11 = arith.constant 0 : index
    %c0_12 = arith.constant 0 : index
    %11 = vector.load %arg3[%c0_9, %c0_10, %c0_11, %c0_12] : memref<1x2x16x128xbf16, #tpu.memory_space<vmem>>, vector<1x2x16x128xbf16>
    %12 = vector.shape_cast %11 : vector<1x2x16x128xbf16> to vector<2x16x128xbf16>
    %13 = arith.extf %12 : vector<2x16x128xbf16> to vector<2x16x128xf32>
    %14 = vector.broadcast %10 : f32 to vector<2x16x128xf32>
    %15 = arith.mulf %13, %14 : vector<2x16x128xf32>
    %c0_13 = arith.constant 0 : index
    %c8_14 = arith.constant 8 : index
    %c0_15 = arith.constant 0 : index
    %16 = vector.load %arg16[%c0_13, %c8_14, %c0_15] : memref<12x32x128xf32, #tpu.memory_space<vmem>>, vector<2x16x128xf32>
    tpu.vector_store %arg16[%c0_13, %c8_14, %c0_15], %15 {strides = array<i32>} : memref<12x32x128xf32, #tpu.memory_space<vmem>>, vector<2x16x128xf32>,
    %c1_i32 = arith.constant 1 : i32
    %17 = arith.cmpi slt, %arg1, %c1_i32 : i32
    %18 = arith.extui %17 : i1 to i32
    %19 = arith.sitofp %18 : i32 to f32
    %c0_16 = arith.constant 0 : index
    %c0_17 = arith.constant 0 : index
    %c0_18 = arith.constant 0 : index
    %c0_19 = arith.constant 0 : index
    %20 = vector.load %arg4[%c0_16, %c0_17, %c0_18, %c0_19] : memref<1x2x16x128xbf16, #tpu.memory_space<vmem>>, vector<1x2x16x128xbf16>
    %21 = vector.shape_cast %20 : vector<1x2x16x128xbf16> to vector<2x16x128xbf16>
    %22 = arith.extf %21 : vector<2x16x128xbf16> to vector<2x16x128xf32>
    %23 = vector.broadcast %19 : f32 to vector<2x16x128xf32>
    %24 = arith.mulf %22, %23 : vector<2x16x128xf32>
    %c10 = arith.constant 10 : index
    %c8_20 = arith.constant 8 : index
    %c0_21 = arith.constant 0 : index
    %25 = vector.load %arg16[%c10, %c8_20, %c0_21] : memref<12x32x128xf32, #tpu.memory_space<vmem>>, vector<2x16x128xf32>
    tpu.vector_store %arg16[%c10, %c8_20, %c0_21], %24 {strides = array<i32>} : memref<12x32x128xf32, #tpu.memory_space<vmem>>, vector<2x16x128xf32>,
    %c0_22 = arith.constant 0 : index
    %c0_23 = arith.constant 0 : index
    %c0_24 = arith.constant 0 : index
    %26 = vector.load %arg5[%c0_22, %c0_23, %c0_24] : memref<3x3x128xf32, #tpu.memory_space<vmem>>, vector<3x3x128xf32>
    %c0_25 = arith.constant 0 : index
    %c0_26 = arith.constant 0 : index
    %27 = vector.load %arg6[%c0_25, %c0_26] : memref<1x128xf32, #tpu.memory_space<vmem>>, vector<1x128xf32>
    %c0_27 = arith.constant 0 : index
    %c7_28 = arith.constant 7 : index
    %c0_29 = arith.constant 0 : index
    %28 = vector.load %arg16[%c0_27, %c7_28, %c0_29] : memref<12x32x128xf32, #tpu.memory_space<vmem>>, vector<12x16x128xf32>
    %29 = vector.extract_strided_slice %28 {offsets = [0, 0, 0], sizes = [10, 16, 128], strides = [1, 1, 1]} : vector<12x16x128xf32> to vector<10x16x128xf32>
    %30 = vector.extract_strided_slice %26 {offsets = [0, 0, 0], sizes = [1, 1, 128], strides = [1, 1, 1]} : vector<3x3x128xf32> to vector<1x1x128xf32>
    %31 = vector.shape_cast %30 : vector<1x1x128xf32> to vector<128xf32>
    %32 = vector.shape_cast %31 : vector<128xf32> to vector<1x1x128xf32>
    %33 = vector.broadcast %32 : vector<1x1x128xf32> to vector<10x16x128xf32>
    %34 = arith.mulf %29, %33 : vector<10x16x128xf32>
    %35 = vector.extract_strided_slice %28 {offsets = [1, 0, 0], sizes = [10, 16, 128], strides = [1, 1, 1]} : vector<12x16x128xf32> to vector<10x16x128xf32>
    %36 = vector.extract_strided_slice %26 {offsets = [1, 0, 0], sizes = [1, 1, 128], strides = [1, 1, 1]} : vector<3x3x128xf32> to vector<1x1x128xf32>
    %37 = vector.shape_cast %36 : vector<1x1x128xf32> to vector<128xf32>
    %38 = vector.shape_cast %37 : vector<128xf32> to vector<1x1x128xf32>
    %39 = vector.broadcast %38 : vector<1x1x128xf32> to vector<10x16x128xf32>
    %40 = arith.mulf %35, %39 : vector<10x16x128xf32>
    %41 = arith.addf %34, %40 : vector<10x16x128xf32>
    %42 = vector.extract_strided_slice %28 {offsets = [2, 0, 0], sizes = [10, 16, 128], strides = [1, 1, 1]} : vector<12x16x128xf32> to vector<10x16x128xf32>
    %43 = vector.extract_strided_slice %26 {offsets = [2, 0, 0], sizes = [1, 1, 128], strides = [1, 1, 1]} : vector<3x3x128xf32> to vector<1x1x128xf32>
    %44 = vector.shape_cast %43 : vector<1x1x128xf32> to vector<128xf32>
    %45 = vector.shape_cast %44 : vector<128xf32> to vector<1x1x128xf32>
    %46 = vector.broadcast %45 : vector<1x1x128xf32> to vector<10x16x128xf32>
    %47 = arith.mulf %42, %46 : vector<10x16x128xf32>
    %48 = arith.addf %41, %47 : vector<10x16x128xf32>
    %c0_30 = arith.constant 0 : index
    %c8_31 = arith.constant 8 : index
    %c0_32 = arith.constant 0 : index
    %49 = vector.load %arg16[%c0_30, %c8_31, %c0_32] : memref<12x32x128xf32, #tpu.memory_space<vmem>>, vector<12x16x128xf32>
    %50 = vector.extract_strided_slice %49 {offsets = [0, 0, 0], sizes = [10, 16, 128], strides = [1, 1, 1]} : vector<12x16x128xf32> to vector<10x16x128xf32>
    %51 = vector.extract_strided_slice %26 {offsets = [0, 1, 0], sizes = [1, 1, 128], strides = [1, 1, 1]} : vector<3x3x128xf32> to vector<1x1x128xf32>
    %52 = vector.shape_cast %51 : vector<1x1x128xf32> to vector<128xf32>
    %53 = vector.shape_cast %52 : vector<128xf32> to vector<1x1x128xf32>
    %54 = vector.broadcast %53 : vector<1x1x128xf32> to vector<10x16x128xf32>
    %55 = arith.mulf %50, %54 : vector<10x16x128xf32>
    %56 = arith.addf %48, %55 : vector<10x16x128xf32>
    %57 = vector.extract_strided_slice %49 {offsets = [1, 0, 0], sizes = [10, 16, 128], strides = [1, 1, 1]} : vector<12x16x128xf32> to vector<10x16x128xf32>
    %58 = vector.extract_strided_slice %26 {offsets = [1, 1, 0], sizes = [1, 1, 128], strides = [1, 1, 1]} : vector<3x3x128xf32> to vector<1x1x128xf32>
    %59 = vector.shape_cast %58 : vector<1x1x128xf32> to vector<128xf32>
    %60 = vector.shape_cast %59 : vector<128xf32> to vector<1x1x128xf32>
    %61 = vector.broadcast %60 : vector<1x1x128xf32> to vector<10x16x128xf32>
    %62 = arith.mulf %57, %61 : vector<10x16x128xf32>
    %63 = arith.addf %56, %62 : vector<10x16x128xf32>
    %64 = vector.extract_strided_slice %49 {offsets = [2, 0, 0], sizes = [10, 16, 128], strides = [1, 1, 1]} : vector<12x16x128xf32> to vector<10x16x128xf32>
    %65 = vector.extract_strided_slice %26 {offsets = [2, 1, 0], sizes = [1, 1, 128], strides = [1, 1, 1]} : vector<3x3x128xf32> to vector<1x1x128xf32>
    %66 = vector.shape_cast %65 : vector<1x1x128xf32> to vector<128xf32>
    %67 = vector.shape_cast %66 : vector<128xf32> to vector<1x1x128xf32>
    %68 = vector.broadcast %67 : vector<1x1x128xf32> to vector<10x16x128xf32>
    %69 = arith.mulf %64, %68 : vector<10x16x128xf32>
    %70 = arith.addf %63, %69 : vector<10x16x128xf32>
    %c0_33 = arith.constant 0 : index
    %c9 = arith.constant 9 : index
    %c0_34 = arith.constant 0 : index
    %71 = vector.load %arg16[%c0_33, %c9, %c0_34] : memref<12x32x128xf32, #tpu.memory_space<vmem>>, vector<12x16x128xf32>
    %72 = vector.extract_strided_slice %71 {offsets = [0, 0, 0], sizes = [10, 16, 128], strides = [1, 1, 1]} : vector<12x16x128xf32> to vector<10x16x128xf32>
    %73 = vector.extract_strided_slice %26 {offsets = [0, 2, 0], sizes = [1, 1, 128], strides = [1, 1, 1]} : vector<3x3x128xf32> to vector<1x1x128xf32>
    %74 = vector.shape_cast %73 : vector<1x1x128xf32> to vector<128xf32>
    %75 = vector.shape_cast %74 : vector<128xf32> to vector<1x1x128xf32>
    %76 = vector.broadcast %75 : vector<1x1x128xf32> to vector<10x16x128xf32>
    %77 = arith.mulf %72, %76 : vector<10x16x128xf32>
    %78 = arith.addf %70, %77 : vector<10x16x128xf32>
    %79 = vector.extract_strided_slice %71 {offsets = [1, 0, 0], sizes = [10, 16, 128], strides = [1, 1, 1]} : vector<12x16x128xf32> to vector<10x16x128xf32>
    %80 = vector.extract_strided_slice %26 {offsets = [1, 2, 0], sizes = [1, 1, 128], strides = [1, 1, 1]} : vector<3x3x128xf32> to vector<1x1x128xf32>
    %81 = vector.shape_cast %80 : vector<1x1x128xf32> to vector<128xf32>
    %82 = vector.shape_cast %81 : vector<128xf32> to vector<1x1x128xf32>
    %83 = vector.broadcast %82 : vector<1x1x128xf32> to vector<10x16x128xf32>
    %84 = arith.mulf %79, %83 : vector<10x16x128xf32>
    %85 = arith.addf %78, %84 : vector<10x16x128xf32>
    %86 = vector.extract_strided_slice %71 {offsets = [2, 0, 0], sizes = [10, 16, 128], strides = [1, 1, 1]} : vector<12x16x128xf32> to vector<10x16x128xf32>
    %87 = vector.extract_strided_slice %26 {offsets = [2, 2, 0], sizes = [1, 1, 128], strides = [1, 1, 1]} : vector<3x3x128xf32> to vector<1x1x128xf32>
    %88 = vector.shape_cast %87 : vector<1x1x128xf32> to vector<128xf32>
    %89 = vector.shape_cast %88 : vector<128xf32> to vector<1x1x128xf32>
    %90 = vector.broadcast %89 : vector<1x1x128xf32> to vector<10x16x128xf32>
    %91 = arith.mulf %86, %90 : vector<10x16x128xf32>
    %92 = arith.addf %85, %91 : vector<10x16x128xf32>
    %93 = vector.shape_cast %27 : vector<1x128xf32> to vector<1x1x128xf32>
    %94 = vector.broadcast %93 : vector<1x1x128xf32> to vector<10x16x128xf32>
    %95 = arith.addf %92, %94 : vector<10x16x128xf32>
    %cst_35 = arith.constant 0.000000e+00 : f32
    %96 = vector.broadcast %cst_35 : f32 to vector<10x16x128xf32>
    %97 = arith.maximumf %95, %96 : vector<10x16x128xf32>
    %98 = vector.shape_cast %97 : vector<10x16x128xf32> to vector<160x128xf32>
    %99 = arith.truncf %98 : vector<160x128xf32> to vector<160x128xbf16>
    %c0_36 = arith.constant 0 : index
    %c0_37 = arith.constant 0 : index
    %100 = vector.load %arg7[%c0_36, %c0_37] : memref<128x128xbf16, #tpu.memory_space<vmem>>, vector<128x128xbf16>
    %cst_38 = arith.constant dense<0.000000e+00> : vector<160x128xf32>
    %101 = tpu.matmul %99, %100, %cst_38 {dimension_numbers = #tpu.dot_dimension_numbers<[1], [0], [0], [1], [0, 0, 1, 1], [], []>} : vector<160x128xbf16>, vector<128x128xbf16>, vector<160x128xf32> -> vector<160x128xf32>
    %c0_39 = arith.constant 0 : index
    %c0_40 = arith.constant 0 : index
    %102 = vector.load %arg8[%c0_39, %c0_40] : memref<1x128xf32, #tpu.memory_space<vmem>>, vector<1x128xf32>
    %103 = vector.broadcast %102 : vector<1x128xf32> to vector<160x128xf32>
    %104 = arith.addf %101, %103 : vector<160x128xf32>
    %cst_41 = arith.constant 0.000000e+00 : f32
    %105 = vector.broadcast %cst_41 : f32 to vector<160x128xf32>
    %106 = arith.maximumf %104, %105 : vector<160x128xf32>
    %107 = vector.shape_cast %106 : vector<160x128xf32> to vector<10x16x128xf32>
    %cst_42 = arith.constant 0.000000e+00 : f32
    %108 = vector.broadcast %cst_42 : f32 to vector<10x1x128xf32>
    %c0_43 = arith.constant 0 : index
    %c7_44 = arith.constant 7 : index
    %c0_45 = arith.constant 0 : index
    %109 = vector.load %arg17[%c0_43, %c7_44, %c0_45] : memref<10x32x128xf32, #tpu.memory_space<vmem>>, vector<10x1x128xf32>
    tpu.vector_store %arg17[%c0_43, %c7_44, %c0_45], %108 {strides = array<i32>} : memref<10x32x128xf32, #tpu.memory_space<vmem>>, vector<10x1x128xf32>,
    %cst_46 = arith.constant 0.000000e+00 : f32
    %110 = vector.broadcast %cst_46 : f32 to vector<10x1x128xf32>
    %c0_47 = arith.constant 0 : index
    %c24_48 = arith.constant 24 : index
    %c0_49 = arith.constant 0 : index
    %111 = vector.load %arg17[%c0_47, %c24_48, %c0_49] : memref<10x32x128xf32, #tpu.memory_space<vmem>>, vector<10x1x128xf32>
    tpu.vector_store %arg17[%c0_47, %c24_48, %c0_49], %110 {strides = array<i32>} : memref<10x32x128xf32, #tpu.memory_space<vmem>>, vector<10x1x128xf32>,
    %c0_50 = arith.constant 0 : index
    %c8_51 = arith.constant 8 : index
    %c0_52 = arith.constant 0 : index
    %112 = vector.load %arg17[%c0_50, %c8_51, %c0_52] : memref<10x32x128xf32, #tpu.memory_space<vmem>>, vector<10x16x128xf32>
    tpu.vector_store %arg17[%c0_50, %c8_51, %c0_52], %107 {strides = array<i32>} : memref<10x32x128xf32, #tpu.memory_space<vmem>>, vector<10x16x128xf32>,
    %c0_i32_53 = arith.constant 0 : i32
    %113 = arith.cmpi eq, %arg1, %c0_i32_53 : i32
    %114 = arith.extui %113 : i1 to i32
    %c0_i32_54 = arith.constant 0 : i32
    %115 = arith.cmpi ne, %114, %c0_i32_54 : i32
    scf.if %115 {
      %cst_86 = arith.constant 0.000000e+00 : f32
      %209 = vector.broadcast %cst_86 : f32 to vector<1x16x128xf32>
      %c0_87 = arith.constant 0 : index
      %c8_88 = arith.constant 8 : index
      %c0_89 = arith.constant 0 : index
      %210 = vector.load %arg17[%c0_87, %c8_88, %c0_89] : memref<10x32x128xf32, #tpu.memory_space<vmem>>, vector<1x16x128xf32>
      tpu.vector_store %arg17[%c0_87, %c8_88, %c0_89], %209 {strides = array<i32>} : memref<10x32x128xf32, #tpu.memory_space<vmem>>, vector<1x16x128xf32>,
    } else {
    }
    %c1_i32_55 = arith.constant 1 : i32
    %116 = arith.cmpi eq, %arg1, %c1_i32_55 : i32
    %117 = arith.extui %116 : i1 to i32
    %c0_i32_56 = arith.constant 0 : i32
    %118 = arith.cmpi ne, %117, %c0_i32_56 : i32
    scf.if %118 {
      %cst_86 = arith.constant 0.000000e+00 : f32
      %209 = vector.broadcast %cst_86 : f32 to vector<1x16x128xf32>
      %c9_87 = arith.constant 9 : index
      %c8_88 = arith.constant 8 : index
      %c0_89 = arith.constant 0 : index
      %210 = vector.load %arg17[%c9_87, %c8_88, %c0_89] : memref<10x32x128xf32, #tpu.memory_space<vmem>>, vector<1x16x128xf32>
      tpu.vector_store %arg17[%c9_87, %c8_88, %c0_89], %209 {strides = array<i32>} : memref<10x32x128xf32, #tpu.memory_space<vmem>>, vector<1x16x128xf32>,
    } else {
    }
    %c0_57 = arith.constant 0 : index
    %c0_58 = arith.constant 0 : index
    %c0_59 = arith.constant 0 : index
    %119 = vector.load %arg9[%c0_57, %c0_58, %c0_59] : memref<3x3x128xf32, #tpu.memory_space<vmem>>, vector<3x3x128xf32>
    %c0_60 = arith.constant 0 : index
    %c0_61 = arith.constant 0 : index
    %120 = vector.load %arg10[%c0_60, %c0_61] : memref<1x128xf32, #tpu.memory_space<vmem>>, vector<1x128xf32>
    %c0_62 = arith.constant 0 : index
    %c7_63 = arith.constant 7 : index
    %c0_64 = arith.constant 0 : index
    %121 = vector.load %arg17[%c0_62, %c7_63, %c0_64] : memref<10x32x128xf32, #tpu.memory_space<vmem>>, vector<10x16x128xf32>
    %122 = vector.extract_strided_slice %121 {offsets = [0, 0, 0], sizes = [8, 16, 128], strides = [1, 1, 1]} : vector<10x16x128xf32> to vector<8x16x128xf32>
    %123 = vector.extract_strided_slice %119 {offsets = [0, 0, 0], sizes = [1, 1, 128], strides = [1, 1, 1]} : vector<3x3x128xf32> to vector<1x1x128xf32>
    %124 = vector.shape_cast %123 : vector<1x1x128xf32> to vector<128xf32>
    %125 = vector.shape_cast %124 : vector<128xf32> to vector<1x1x128xf32>
    %126 = vector.broadcast %125 : vector<1x1x128xf32> to vector<8x16x128xf32>
    %127 = arith.mulf %122, %126 : vector<8x16x128xf32>
    %128 = vector.extract_strided_slice %121 {offsets = [1, 0, 0], sizes = [8, 16, 128], strides = [1, 1, 1]} : vector<10x16x128xf32> to vector<8x16x128xf32>
    %129 = vector.extract_strided_slice %119 {offsets = [1, 0, 0], sizes = [1, 1, 128], strides = [1, 1, 1]} : vector<3x3x128xf32> to vector<1x1x128xf32>
    %130 = vector.shape_cast %129 : vector<1x1x128xf32> to vector<128xf32>
    %131 = vector.shape_cast %130 : vector<128xf32> to vector<1x1x128xf32>
    %132 = vector.broadcast %131 : vector<1x1x128xf32> to vector<8x16x128xf32>
    %133 = arith.mulf %128, %132 : vector<8x16x128xf32>
    %134 = arith.addf %127, %133 : vector<8x16x128xf32>
    %135 = vector.extract_strided_slice %121 {offsets = [2, 0, 0], sizes = [8, 16, 128], strides = [1, 1, 1]} : vector<10x16x128xf32> to vector<8x16x128xf32>
    %136 = vector.extract_strided_slice %119 {offsets = [2, 0, 0], sizes = [1, 1, 128], strides = [1, 1, 1]} : vector<3x3x128xf32> to vector<1x1x128xf32>
    %137 = vector.shape_cast %136 : vector<1x1x128xf32> to vector<128xf32>
    %138 = vector.shape_cast %137 : vector<128xf32> to vector<1x1x128xf32>
    %139 = vector.broadcast %138 : vector<1x1x128xf32> to vector<8x16x128xf32>
    %140 = arith.mulf %135, %139 : vector<8x16x128xf32>
    %141 = arith.addf %134, %140 : vector<8x16x128xf32>
    %c0_65 = arith.constant 0 : index
    %c8_66 = arith.constant 8 : index
    %c0_67 = arith.constant 0 : index
    %142 = vector.load %arg17[%c0_65, %c8_66, %c0_67] : memref<10x32x128xf32, #tpu.memory_space<vmem>>, vector<10x16x128xf32>
    %143 = vector.extract_strided_slice %142 {offsets = [0, 0, 0], sizes = [8, 16, 128], strides = [1, 1, 1]} : vector<10x16x128xf32> to vector<8x16x128xf32>
    %144 = vector.extract_strided_slice %119 {offsets = [0, 1, 0], sizes = [1, 1, 128], strides = [1, 1, 1]} : vector<3x3x128xf32> to vector<1x1x128xf32>
    %145 = vector.shape_cast %144 : vector<1x1x128xf32> to vector<128xf32>
    %146 = vector.shape_cast %145 : vector<128xf32> to vector<1x1x128xf32>
    %147 = vector.broadcast %146 : vector<1x1x128xf32> to vector<8x16x128xf32>
    %148 = arith.mulf %143, %147 : vector<8x16x128xf32>
    %149 = arith.addf %141, %148 : vector<8x16x128xf32>
    %150 = vector.extract_strided_slice %142 {offsets = [1, 0, 0], sizes = [8, 16, 128], strides = [1, 1, 1]} : vector<10x16x128xf32> to vector<8x16x128xf32>
    %151 = vector.extract_strided_slice %119 {offsets = [1, 1, 0], sizes = [1, 1, 128], strides = [1, 1, 1]} : vector<3x3x128xf32> to vector<1x1x128xf32>
    %152 = vector.shape_cast %151 : vector<1x1x128xf32> to vector<128xf32>
    %153 = vector.shape_cast %152 : vector<128xf32> to vector<1x1x128xf32>
    %154 = vector.broadcast %153 : vector<1x1x128xf32> to vector<8x16x128xf32>
    %155 = arith.mulf %150, %154 : vector<8x16x128xf32>
    %156 = arith.addf %149, %155 : vector<8x16x128xf32>
    %157 = vector.extract_strided_slice %142 {offsets = [2, 0, 0], sizes = [8, 16, 128], strides = [1, 1, 1]} : vector<10x16x128xf32> to vector<8x16x128xf32>
    %158 = vector.extract_strided_slice %119 {offsets = [2, 1, 0], sizes = [1, 1, 128], strides = [1, 1, 1]} : vector<3x3x128xf32> to vector<1x1x128xf32>
    %159 = vector.shape_cast %158 : vector<1x1x128xf32> to vector<128xf32>
    %160 = vector.shape_cast %159 : vector<128xf32> to vector<1x1x128xf32>
    %161 = vector.broadcast %160 : vector<1x1x128xf32> to vector<8x16x128xf32>
    %162 = arith.mulf %157, %161 : vector<8x16x128xf32>
    %163 = arith.addf %156, %162 : vector<8x16x128xf32>
    %c0_68 = arith.constant 0 : index
    %c9_69 = arith.constant 9 : index
    %c0_70 = arith.constant 0 : index
    %164 = vector.load %arg17[%c0_68, %c9_69, %c0_70] : memref<10x32x128xf32, #tpu.memory_space<vmem>>, vector<10x16x128xf32>
    %165 = vector.extract_strided_slice %164 {offsets = [0, 0, 0], sizes = [8, 16, 128], strides = [1, 1, 1]} : vector<10x16x128xf32> to vector<8x16x128xf32>
    %166 = vector.extract_strided_slice %119 {offsets = [0, 2, 0], sizes = [1, 1, 128], strides = [1, 1, 1]} : vector<3x3x128xf32> to vector<1x1x128xf32>
    %167 = vector.shape_cast %166 : vector<1x1x128xf32> to vector<128xf32>
    %168 = vector.shape_cast %167 : vector<128xf32> to vector<1x1x128xf32>
    %169 = vector.broadcast %168 : vector<1x1x128xf32> to vector<8x16x128xf32>
    %170 = arith.mulf %165, %169 : vector<8x16x128xf32>
    %171 = arith.addf %163, %170 : vector<8x16x128xf32>
    %172 = vector.extract_strided_slice %164 {offsets = [1, 0, 0], sizes = [8, 16, 128], strides = [1, 1, 1]} : vector<10x16x128xf32> to vector<8x16x128xf32>
    %173 = vector.extract_strided_slice %119 {offsets = [1, 2, 0], sizes = [1, 1, 128], strides = [1, 1, 1]} : vector<3x3x128xf32> to vector<1x1x128xf32>
    %174 = vector.shape_cast %173 : vector<1x1x128xf32> to vector<128xf32>
    %175 = vector.shape_cast %174 : vector<128xf32> to vector<1x1x128xf32>
    %176 = vector.broadcast %175 : vector<1x1x128xf32> to vector<8x16x128xf32>
    %177 = arith.mulf %172, %176 : vector<8x16x128xf32>
    %178 = arith.addf %171, %177 : vector<8x16x128xf32>
    %179 = vector.extract_strided_slice %164 {offsets = [2, 0, 0], sizes = [8, 16, 128], strides = [1, 1, 1]} : vector<10x16x128xf32> to vector<8x16x128xf32>
    %180 = vector.extract_strided_slice %119 {offsets = [2, 2, 0], sizes = [1, 1, 128], strides = [1, 1, 1]} : vector<3x3x128xf32> to vector<1x1x128xf32>
    %181 = vector.shape_cast %180 : vector<1x1x128xf32> to vector<128xf32>
    %182 = vector.shape_cast %181 : vector<128xf32> to vector<1x1x128xf32>
    %183 = vector.broadcast %182 : vector<1x1x128xf32> to vector<8x16x128xf32>
    %184 = arith.mulf %179, %183 : vector<8x16x128xf32>
    %185 = arith.addf %178, %184 : vector<8x16x128xf32>
    %186 = vector.shape_cast %120 : vector<1x128xf32> to vector<1x1x128xf32>
    %187 = vector.broadcast %186 : vector<1x1x128xf32> to vector<8x16x128xf32>
    %188 = arith.addf %185, %187 : vector<8x16x128xf32>
    %cst_71 = arith.constant 0.000000e+00 : f32
    %189 = vector.broadcast %cst_71 : f32 to vector<8x16x128xf32>
    %190 = arith.maximumf %188, %189 : vector<8x16x128xf32>
    %191 = vector.shape_cast %190 : vector<8x16x128xf32> to vector<128x128xf32>
    %192 = arith.truncf %191 : vector<128x128xf32> to vector<128x128xbf16>
    %c0_72 = arith.constant 0 : index
    %c0_73 = arith.constant 0 : index
    %193 = vector.load %arg11[%c0_72, %c0_73] : memref<128x128xbf16, #tpu.memory_space<vmem>>, vector<128x128xbf16>
    %cst_74 = arith.constant dense<0.000000e+00> : vector<128x128xf32>
    %194 = tpu.matmul %192, %193, %cst_74 {dimension_numbers = #tpu.dot_dimension_numbers<[1], [0], [0], [1], [0, 0, 1, 1], [], []>} : vector<128x128xbf16>, vector<128x128xbf16>, vector<128x128xf32> -> vector<128x128xf32>
    %c0_75 = arith.constant 0 : index
    %c0_76 = arith.constant 0 : index
    %195 = vector.load %arg12[%c0_75, %c0_76] : memref<1x128xf32, #tpu.memory_space<vmem>>, vector<1x128xf32>
    %196 = vector.broadcast %195 : vector<1x128xf32> to vector<128x128xf32>
    %197 = arith.addf %194, %196 : vector<128x128xf32>
    %cst_77 = arith.constant 0.000000e+00 : f32
    %198 = vector.broadcast %cst_77 : f32 to vector<128x128xf32>
    %199 = arith.maximumf %197, %198 : vector<128x128xf32>
    %c0_78 = arith.constant 0 : index
    %c0_79 = arith.constant 0 : index
    %200 = vector.load %arg13[%c0_78, %c0_79] : memref<8x128xbf16, #tpu.memory_space<vmem>>, vector<8x128xbf16>
    %201 = arith.truncf %199 : vector<128x128xf32> to vector<128x128xbf16>
    %cst_80 = arith.constant dense<0.000000e+00> : vector<8x128xf32>
    %202 = tpu.matmul %200, %201, %cst_80 {dimension_numbers = #tpu.dot_dimension_numbers<[1], [1], [0], [0], [0, 0, 1, 0], [], []>} : vector<8x128xbf16>, vector<128x128xbf16>, vector<8x128xf32> -> vector<8x128xf32>
    %c0_81 = arith.constant 0 : index
    %c0_82 = arith.constant 0 : index
    %203 = vector.load %arg14[%c0_81, %c0_82] : memref<8x1xf32, #tpu.memory_space<vmem>>, vector<8x1xf32>
    %204 = vector.broadcast %203 : vector<8x1xf32> to vector<8x128xf32>
    %205 = arith.addf %202, %204 : vector<8x128xf32>
    %c0_83 = arith.constant 0 : index
    %c0_84 = arith.constant 0 : index
    %c0_85 = arith.constant 0 : index
    %206 = vector.load %arg15[%c0_83, %c0_84, %c0_85] : memref<1x8x128xf32, #tpu.memory_space<vmem>>, vector<1x8x128xf32>
    %207 = vector.shape_cast %206 : vector<1x8x128xf32> to vector<8x128xf32>
    %208 = vector.shape_cast %205 : vector<8x128xf32> to vector<1x8x128xf32>
    tpu.vector_store %arg15[%c0_83, %c0_84, %c0_85], %208 {strides = array<i32>} : memref<1x8x128xf32, #tpu.memory_space<vmem>>, vector<1x8x128xf32>,
    return
  }
  func.func @transform_0(%arg0: i32, %arg1: i32) -> (i32, i32, i32, i32) {
    %c0_i32 = arith.constant 0 : i32
    %c0_i32_0 = arith.constant 0 : i32
    %c0_i32_1 = arith.constant 0 : i32
    return %arg0, %arg1, %c0_i32, %c0_i32_0 : i32, i32, i32, i32
  }
  func.func @transform_1(%arg0: i32, %arg1: i32) -> (i32, i32, i32, i32) {
    %c4_i32 = arith.constant 4 : i32
    %0 = arith.muli %arg1, %c4_i32 : i32
    %c1_i32 = arith.constant 1 : i32
    %1 = arith.subi %0, %c1_i32 : i32
    %c0_i32 = arith.constant 0 : i32
    %2 = arith.maxsi %1, %c0_i32 : i32
    %c0_i32_0 = arith.constant 0 : i32
    %c0_i32_1 = arith.constant 0 : i32
    %c0_i32_2 = arith.constant 0 : i32
    return %arg0, %2, %c0_i32_0, %c0_i32_1 : i32, i32, i32, i32
  }
  func.func @transform_2(%arg0: i32, %arg1: i32) -> (i32, i32, i32, i32) {
    %c1_i32 = arith.constant 1 : i32
    %0 = arith.addi %arg1, %c1_i32 : i32
    %c4_i32 = arith.constant 4 : i32
    %1 = arith.muli %0, %c4_i32 : i32
    %c7_i32 = arith.constant 7 : i32
    %2 = arith.minsi %1, %c7_i32 : i32
    %c0_i32 = arith.constant 0 : i32
    %c0_i32_0 = arith.constant 0 : i32
    %c0_i32_1 = arith.constant 0 : i32
    return %arg0, %2, %c0_i32, %c0_i32_0 : i32, i32, i32, i32
  }
  func.func @transform_3(%arg0: i32, %arg1: i32) -> (i32, i32, i32) {
    %c0_i32 = arith.constant 0 : i32
    %c0_i32_0 = arith.constant 0 : i32
    %c0_i32_1 = arith.constant 0 : i32
    %c0_i32_2 = arith.constant 0 : i32
    return %c0_i32, %c0_i32_0, %c0_i32_1 : i32, i32, i32
  }
  func.func @transform_4(%arg0: i32, %arg1: i32) -> (i32, i32) {
    %c0_i32 = arith.constant 0 : i32
    %c0_i32_0 = arith.constant 0 : i32
    %c0_i32_1 = arith.constant 0 : i32
    return %c0_i32, %c0_i32_0 : i32, i32
  }
  func.func @transform_5(%arg0: i32, %arg1: i32) -> (i32, i32) {
    %c0_i32 = arith.constant 0 : i32
    %c0_i32_0 = arith.constant 0 : i32
    %c0_i32_1 = arith.constant 0 : i32
    return %c0_i32, %c0_i32_0 : i32, i32
  }
  func.func @transform_6(%arg0: i32, %arg1: i32) -> (i32, i32) {
    %c0_i32 = arith.constant 0 : i32
    %c0_i32_0 = arith.constant 0 : i32
    %c0_i32_1 = arith.constant 0 : i32
    return %c0_i32, %c0_i32_0 : i32, i32
  }
  func.func @transform_7(%arg0: i32, %arg1: i32) -> (i32, i32, i32) {
    %c0_i32 = arith.constant 0 : i32
    %c0_i32_0 = arith.constant 0 : i32
    %c0_i32_1 = arith.constant 0 : i32
    %c0_i32_2 = arith.constant 0 : i32
    return %c0_i32, %c0_i32_0, %c0_i32_1 : i32, i32, i32
  }
  func.func @transform_8(%arg0: i32, %arg1: i32) -> (i32, i32) {
    %c0_i32 = arith.constant 0 : i32
    %c0_i32_0 = arith.constant 0 : i32
    %c0_i32_1 = arith.constant 0 : i32
    return %c0_i32, %c0_i32_0 : i32, i32
  }
  func.func @transform_9(%arg0: i32, %arg1: i32) -> (i32, i32) {
    %c0_i32 = arith.constant 0 : i32
    %c0_i32_0 = arith.constant 0 : i32
    %c0_i32_1 = arith.constant 0 : i32
    return %c0_i32, %c0_i32_0 : i32, i32
  }
  func.func @transform_10(%arg0: i32, %arg1: i32) -> (i32, i32) {
    %c0_i32 = arith.constant 0 : i32
    %c0_i32_0 = arith.constant 0 : i32
    %c0_i32_1 = arith.constant 0 : i32
    return %c0_i32, %c0_i32_0 : i32, i32
  }
  func.func @transform_11(%arg0: i32, %arg1: i32) -> (i32, i32) {
    %c0_i32 = arith.constant 0 : i32
    %c0_i32_0 = arith.constant 0 : i32
    %c0_i32_1 = arith.constant 0 : i32
    return %c0_i32, %c0_i32_0 : i32, i32
  }
  func.func @transform_12(%arg0: i32, %arg1: i32) -> (i32, i32) {
    %c0_i32 = arith.constant 0 : i32
    %c0_i32_0 = arith.constant 0 : i32
    %c0_i32_1 = arith.constant 0 : i32
    return %c0_i32, %c0_i32_0 : i32, i32
  }
  func.func @transform_13(%arg0: i32, %arg1: i32) -> (i32, i32, i32) {
    %c0_i32 = arith.constant 0 : i32
    %c0_i32_0 = arith.constant 0 : i32
    return %arg0, %c0_i32, %arg1 : i32, i32, i32
  }
}

</mosaic_0001>

<llo_original>
// kernel: tpu_custom_call.1
$region0: #{tpu_custom_call.1}
  #allocation0 [shape = 'u32[]', space=smem, size = 0x4, offset = 0x4, fixed_abs, tag = 'smem constant byte address 0x4 - core index']
  #allocation1 [shape = 'u32[144,128]{1,0:T(1,128)}', space=vmem, size = 0x12000, scoped, tag = 'internal scratch']
  #allocation2 [shape = 'f32[12,32,128]{2,1,0:T(8,128)}', space=vmem, size = 0x30000, scoped, tag = 'scratch operand']
  #allocation3 [shape = 'f32[10,32,128]{2,1,0:T(8,128)}', space=vmem, size = 0x28000, scoped, tag = 'scratch operand']
  %s0 = inlined_call_operand.hbm [shape: bf16[2,16,16,128], index: 0, kind: input, shape index: {}]
  %s1 = inlined_call_operand.hbm [shape: bf16[2,16,16,128], index: 1, kind: input, shape index: {}]
  %s2 = inlined_call_operand.hbm [shape: bf16[2,16,16,128], index: 2, kind: input, shape index: {}]
  %s3 = inlined_call_operand.hbm [shape: f32[3,3,128], index: 3, kind: input, shape index: {}]
  %s4 = inlined_call_operand.hbm [shape: f32[1,128], index: 4, kind: input, shape index: {}]
  %s5 = inlined_call_operand.hbm [shape: bf16[128,128], index: 5, kind: input, shape index: {}]
  %s6 = inlined_call_operand.hbm [shape: f32[1,128], index: 6, kind: input, shape index: {}]
  %s7 = inlined_call_operand.hbm [shape: f32[3,3,128], index: 7, kind: input, shape index: {}]
  %s8 = inlined_call_operand.hbm [shape: f32[1,128], index: 8, kind: input, shape index: {}]
  %s9 = inlined_call_operand.hbm [shape: bf16[128,128], index: 9, kind: input, shape index: {}]
  %s10 = inlined_call_operand.hbm [shape: f32[1,128], index: 10, kind: input, shape index: {}]
  %s11 = inlined_call_operand.hbm [shape: bf16[8,128], index: 11, kind: input, shape index: {}]
  %s12 = inlined_call_operand.hbm [shape: f32[8,1], index: 12, kind: input, shape index: {}]
  %s13 = inlined_call_operand.hbm [shape: f32[2,8,256], index: 13, kind: output, shape index: {}]
  %s14 = sld [smem:[#allocation0]]
  $region145: #{tpu_custom_call.1} parent=0
    _
  %s16 = ssub.s32 1, %s14
  %s17 = scalar_select 0, %s16, %s14
  $region1: #{tpu_custom_call.1} parent=0
    #allocation4 [shape = 'u8[65536]{0}', space=vmem, size = 0x10000, scoped, tag = 'input window, operand 0']
    #allocation5 [shape = 's32[2]{0}', space=sflag, size = 0x8, scoped, tag = 'scoped memory for tpu_custom_call.1']
    #allocation6 [shape = 's32[2]{0}', space=sflag, size = 0x8, scoped, tag = 'scoped memory for tpu_custom_call.1']
    #allocation7 [shape = 'u8[16384]{0}', space=vmem, size = 0x4000, scoped, tag = 'input window, operand 1']
    #allocation8 [shape = 's32[2]{0}', space=sflag, size = 0x8, scoped, tag = 'scoped memory for tpu_custom_call.1']
    #allocation9 [shape = 'u8[16384]{0}', space=vmem, size = 0x4000, scoped, tag = 'input window, operand 2']
    #allocation10 [shape = 'u8[6144]{0}', space=vmem, size = 0x1800, scoped, tag = 'input window, operand 3, single buffered']
    #allocation11 [shape = 's32[1]{0}', space=sflag, size = 0x4, scoped, tag = 'scoped memory for tpu_custom_call.1']
    #allocation12 [shape = 'u8[512]{0}', space=vmem, size = 0x400, scoped, tag = 'input window, operand 4, single buffered']
    #allocation13 [shape = 'u8[32768]{0}', space=vmem, size = 0x8000, scoped, tag = 'input window, operand 5, single buffered']
    #allocation14 [shape = 's32[1]{0}', space=sflag, size = 0x4, scoped, tag = 'scoped memory for tpu_custom_call.1']
    #allocation15 [shape = 'u8[512]{0}', space=vmem, size = 0x400, scoped, tag = 'input window, operand 6, single buffered']
    #allocation16 [shape = 'u8[6144]{0}', space=vmem, size = 0x1800, scoped, tag = 'input window, operand 7, single buffered']
    #allocation17 [shape = 's32[1]{0}', space=sflag, size = 0x4, scoped, tag = 'scoped memory for tpu_custom_call.1']
    #allocation18 [shape = 'u8[512]{0}', space=vmem, size = 0x400, scoped, tag = 'input window, operand 8, single buffered']
    #allocation19 [shape = 'u8[32768]{0}', space=vmem, size = 0x8000, scoped, tag = 'input window, operand 9, single buffered']
    #allocation20 [shape = 's32[1]{0}', space=sflag, size = 0x4, scoped, tag = 'scoped memory for tpu_custom_call.1']
    #allocation21 [shape = 'u8[512]{0}', space=vmem, size = 0x400, scoped, tag = 'input window, operand 10, single buffered']
    #allocation22 [shape = 'u8[2048]{0}', space=vmem, size = 0x800, scoped, tag = 'input window, operand 11, single buffered']
    #allocation23 [shape = 's32[1]{0}', space=sflag, size = 0x4, scoped, tag = 'scoped memory for tpu_custom_call.1']
    #allocation24 [shape = 'u8[4096]{0}', space=vmem, size = 0x1000, scoped, tag = 'input window, operand 12, single buffered']
    #allocation25 [shape = 'u8[8192]{0}', space=vmem, size = 0x2000, scoped, tag = 'output window, operand 0']
    %18 = vsyncpa [#allocation5], 0
    %s19 = scalar_lea.sflag [#allocation5], 1
    %20 = vsyncpa %s19, 0
    %21 = vsyncpa [#allocation8], 0
    %s22 = scalar_lea.sflag [#allocation8], 1
    %23 = vsyncpa %s22, 0
    %24 = vsyncpa [#allocation11], 0
    %25 = vsyncpa [#allocation14], 0
    %26 = vsyncpa [#allocation17], 0
    %27 = vsyncpa [#allocation20], 0
    %28 = vsyncpa [#allocation23], 0
    %29 = vsyncpa [#allocation6], 0
    %s30 = scalar_lea.sflag [#allocation6], 1
    %31 = vsyncpa %s30, 0
    loop: start=0, step=1, limit=6
    $region2: #{tpu_custom_call.1} parent=1 // loop_pre_header
      _
    $region3: #{tpu_custom_call.1} parent=1 // loop_header
      %s33 = sphi 0, %s37
      %p34 = scmp.ge.s32.totalorder %s33, 6
      %s40 = sphi 0, %s52
      %s41 = sphi 0, %s48
      %s42 = sphi 0, %s40
      %s43 = sphi 0, %s41
      %s44 = sphi 0, %s42
      %s45 = sphi 0, %s43
      %s57 = sphi 0, %s59
      %s60 = sphi 0, %s57
      %s61 = sphi 0, %s60
      %s77 = sphi 0, %s61
      %s93 = sphi 0, %s95
      %s96 = sphi 0, %s93
      %s97 = sphi 0, %s96
      %s113 = sphi 0, %s97
      %s129 = sphi 0, %s131
      %s132 = sphi 0, %s129
      %s133 = sphi 0, %s132
      %s149 = sphi 0, %s133
      %s153 = sphi 0, %s153
      %s155 = sphi 0, %s153
      %s156 = sphi 0, %s155
      %s170 = sphi 0, %s156
      %s174 = sphi 0, %s174
      %s176 = sphi 0, %s174
      %s177 = sphi 0, %s176
      %s191 = sphi 0, %s177
      %s195 = sphi 0, %s195
      %s197 = sphi 0, %s195
      %s198 = sphi 0, %s197
      %s212 = sphi 0, %s198
      %s216 = sphi 0, %s216
      %s218 = sphi 0, %s216
      %s219 = sphi 0, %s218
      %s233 = sphi 0, %s219
      %s237 = sphi 0, %s237
      %s239 = sphi 0, %s237
      %s240 = sphi 0, %s239
      %s254 = sphi 0, %s240
      %s258 = sphi 0, %s258
      %s260 = sphi 0, %s258
      %s261 = sphi 0, %s260
      %s275 = sphi 0, %s261
      %s279 = sphi 0, %s279
      %s281 = sphi 0, %s279
      %s282 = sphi 0, %s281
      %s296 = sphi 0, %s282
      %s300 = sphi 0, %s300
      %s302 = sphi 0, %s300
      %s303 = sphi 0, %s302
      %s317 = sphi 0, %s303
      %s321 = sphi 0, %s321
      %s323 = sphi 0, %s321
      %s324 = sphi 0, %s323
      %s338 = sphi 0, %s324
      %s342 = sphi 0, %s342
      %s344 = sphi 0, %s342
      %s345 = sphi 0, %s344
      %s359 = sphi 0, %s345
      %s367 = sphi 0, %s369
      %s370 = sphi 0, %s367
      %s371 = sphi 0, %s370
      %s387 = sphi 0, %s371
    $region4: #{tpu_custom_call.1} parent=1 // loop_header_branch
      %36 = sbr.rel (%p34) target = $region8
    $region5: #{tpu_custom_call.1} parent=1 // loop_body
      %s38 = ssub.s32 %s33, 1
      %s39 = ssub.s32 %s33, 2
      %s46 = sadd.s32 1, %s41
      %p47 = scmp.ge.s32.totalorder %s46, 2
      %s48 = scalar_select %p47, 0, %s46
      %s49 = sadd.s32 1, %s40
      %s50 = scalar_select %p47, %s49, %s40
      %p51 = scmp.ge.s32.totalorder %s50, 2
      %s52 = scalar_select %p51, 0, %s50
      %s53 = ssub.s32 %s40, %s52
      %s54 = ssub.s32 %s41, %s48
      %s55 = sor.u32 %s53, %s54
      %p56 = scmp.eq.s32.totalorder %s55, 0
      %s58 = sadd.s32 %s57, 1
      %s59 = scalar_select %p56, %s57, %s58
      %p62 = pneg %p56
      %p63 = scmp.eq.s32.totalorder %s33, 3
      %p64 = por %p62, %p63
      %p65 = scmp.ne.s32.totalorder %s57, %s60
      %p66 = scmp.eq.s32.totalorder %s33, 0
      %p67 = por %p65, %p66
      %p68 = scmp.ne.s32.totalorder %s57, %s60
      %p69 = scmp.eq.s32.totalorder %s38, 3
      %p70 = por %p68, %p69
      %p71 = scmp.ne.s32.totalorder %s60, %s61
      %p72 = scmp.eq.s32.totalorder %s38, 0
      %p73 = por %p71, %p72
      %p74 = scmp.ne.s32.totalorder %s60, %s61
      %p75 = scmp.eq.s32.totalorder %s39, 3
      %p76 = por %p74, %p75
      %p78 = scmp.ne.s32.totalorder %s61, %s77
      %p79 = scmp.eq.s32.totalorder %s39, 0
      %p80 = por %p78, %p79
      %s81 = smul.u32 %s41, 4
      %s82 = ssub.s32 %s81, 1
      %p83 = scmp.gt.s32.totalorder %s82, 0
      %s84 = scalar_select %p83, %s82, 0
      %s85 = smul.u32 %s48, 4
      %s86 = ssub.s32 %s85, 1
      %p87 = scmp.gt.s32.totalorder %s86, 0
      %s88 = scalar_select %p87, %s86, 0
      %s89 = ssub.s32 %s40, %s52
      %s90 = ssub.s32 %s84, %s88
      %s91 = sor.u32 %s89, %s90
      %p92 = scmp.eq.s32.totalorder %s91, 0
      %s94 = sadd.s32 %s93, 1
      %s95 = scalar_select %p92, %s93, %s94
      %p98 = pneg %p92
      %p99 = scmp.eq.s32.totalorder %s33, 3
      %p100 = por %p98, %p99
      %p101 = scmp.ne.s32.totalorder %s93, %s96
      %p102 = scmp.eq.s32.totalorder %s33, 0
      %p103 = por %p101, %p102
      %p104 = scmp.ne.s32.totalorder %s93, %s96
      %p105 = scmp.eq.s32.totalorder %s38, 3
      %p106 = por %p104, %p105
      %p107 = scmp.ne.s32.totalorder %s96, %s97
      %p108 = scmp.eq.s32.totalorder %s38, 0
      %p109 = por %p107, %p108
      %p110 = scmp.ne.s32.totalorder %s96, %s97
      %p111 = scmp.eq.s32.totalorder %s39, 3
      %p112 = por %p110, %p111
      %p114 = scmp.ne.s32.totalorder %s97, %s113
      %p115 = scmp.eq.s32.totalorder %s39, 0
      %p116 = por %p114, %p115
      %s117 = sadd.s32 %s41, 1
      %s118 = smul.u32 %s117, 4
      %p119 = scmp.lt.s32.totalorder %s118, 7
      %s120 = scalar_select %p119, %s118, 7
      %s121 = sadd.s32 %s48, 1
      %s122 = smul.u32 %s121, 4
      %p123 = scmp.lt.s32.totalorder %s122, 7
      %s124 = scalar_select %p123, %s122, 7
      %s125 = ssub.s32 %s40, %s52
      %s126 = ssub.s32 %s120, %s124
      %s127 = sor.u32 %s125, %s126
      %p128 = scmp.eq.s32.totalorder %s127, 0
      %s130 = sadd.s32 %s129, 1
      %s131 = scalar_select %p128, %s129, %s130
      %p134 = pneg %p128
      %p135 = scmp.eq.s32.totalorder %s33, 3
      %p136 = por %p134, %p135
      %p137 = scmp.ne.s32.totalorder %s129, %s132
      %p138 = scmp.eq.s32.totalorder %s33, 0
      %p139 = por %p137, %p138
      %p140 = scmp.ne.s32.totalorder %s129, %s132
      %p141 = scmp.eq.s32.totalorder %s38, 3
      %p142 = por %p140, %p141
      %p143 = scmp.ne.s32.totalorder %s132, %s133
      %p144 = scmp.eq.s32.totalorder %s38, 0
      %p145 = por %p143, %p144
      %p146 = scmp.ne.s32.totalorder %s132, %s133
      %p147 = scmp.eq.s32.totalorder %s39, 3
      %p148 = por %p146, %p147
      %p150 = scmp.ne.s32.totalorder %s133, %s149
      %p151 = scmp.eq.s32.totalorder %s39, 0
      %p152 = por %p150, %p151
      %s154 = sadd.s32 %s153, 1
      %p157 = scmp.eq.s32.totalorder %s33, 3
      %p158 = scmp.ne.s32.totalorder %s153, %s155
      %p159 = scmp.eq.s32.totalorder %s33, 0
      %p160 = por %p158, %p159
      %p161 = scmp.ne.s32.totalorder %s153, %s155
      %p162 = scmp.eq.s32.totalorder %s38, 3
      %p163 = por %p161, %p162
      %p164 = scmp.ne.s32.totalorder %s155, %s156
      %p165 = scmp.eq.s32.totalorder %s38, 0
      %p166 = por %p164, %p165
      %p167 = scmp.ne.s32.totalorder %s155, %s156
      %p168 = scmp.eq.s32.totalorder %s39, 3
      %p169 = por %p167, %p168
      %p171 = scmp.ne.s32.totalorder %s156, %s170
      %p172 = scmp.eq.s32.totalorder %s39, 0
      %p173 = por %p171, %p172
      %s175 = sadd.s32 %s174, 1
      %p178 = scmp.eq.s32.totalorder %s33, 3
      %p179 = scmp.ne.s32.totalorder %s174, %s176
      %p180 = scmp.eq.s32.totalorder %s33, 0
      %p181 = por %p179, %p180
      %p182 = scmp.ne.s32.totalorder %s174, %s176
      %p183 = scmp.eq.s32.totalorder %s38, 3
      %p184 = por %p182, %p183
      %p185 = scmp.ne.s32.totalorder %s176, %s177
      %p186 = scmp.eq.s32.totalorder %s38, 0
      %p187 = por %p185, %p186
      %p188 = scmp.ne.s32.totalorder %s176, %s177
      %p189 = scmp.eq.s32.totalorder %s39, 3
      %p190 = por %p188, %p189
      %p192 = scmp.ne.s32.totalorder %s177, %s191
      %p193 = scmp.eq.s32.totalorder %s39, 0
      %p194 = por %p192, %p193
      %s196 = sadd.s32 %s195, 1
      %p199 = scmp.eq.s32.totalorder %s33, 3
      %p200 = scmp.ne.s32.totalorder %s195, %s197
      %p201 = scmp.eq.s32.totalorder %s33, 0
      %p202 = por %p200, %p201
      %p203 = scmp.ne.s32.totalorder %s195, %s197
      %p204 = scmp.eq.s32.totalorder %s38, 3
      %p205 = por %p203, %p204
      %p206 = scmp.ne.s32.totalorder %s197, %s198
      %p207 = scmp.eq.s32.totalorder %s38, 0
      %p208 = por %p206, %p207
      %p209 = scmp.ne.s32.totalorder %s197, %s198
      %p210 = scmp.eq.s32.totalorder %s39, 3
      %p211 = por %p209, %p210
      %p213 = scmp.ne.s32.totalorder %s198, %s212
      %p214 = scmp.eq.s32.totalorder %s39, 0
      %p215 = por %p213, %p214
      %s217 = sadd.s32 %s216, 1
      %p220 = scmp.eq.s32.totalorder %s33, 3
      %p221 = scmp.ne.s32.totalorder %s216, %s218
      %p222 = scmp.eq.s32.totalorder %s33, 0
      %p223 = por %p221, %p222
      %p224 = scmp.ne.s32.totalorder %s216, %s218
      %p225 = scmp.eq.s32.totalorder %s38, 3
      %p226 = por %p224, %p225
      %p227 = scmp.ne.s32.totalorder %s218, %s219
      %p228 = scmp.eq.s32.totalorder %s38, 0
      %p229 = por %p227, %p228
      %p230 = scmp.ne.s32.totalorder %s218, %s219
      %p231 = scmp.eq.s32.totalorder %s39, 3
      %p232 = por %p230, %p231
      %p234 = scmp.ne.s32.totalorder %s219, %s233
      %p235 = scmp.eq.s32.totalorder %s39, 0
      %p236 = por %p234, %p235
      %s238 = sadd.s32 %s237, 1
      %p241 = scmp.eq.s32.totalorder %s33, 3
      %p242 = scmp.ne.s32.totalorder %s237, %s239
      %p243 = scmp.eq.s32.totalorder %s33, 0
      %p244 = por %p242, %p243
      %p245 = scmp.ne.s32.totalorder %s237, %s239
      %p246 = scmp.eq.s32.totalorder %s38, 3
      %p247 = por %p245, %p246
      %p248 = scmp.ne.s32.totalorder %s239, %s240
      %p249 = scmp.eq.s32.totalorder %s38, 0
      %p250 = por %p248, %p249
      %p251 = scmp.ne.s32.totalorder %s239, %s240
      %p252 = scmp.eq.s32.totalorder %s39, 3
      %p253 = por %p251, %p252
      %p255 = scmp.ne.s32.totalorder %s240, %s254
      %p256 = scmp.eq.s32.totalorder %s39, 0
      %p257 = por %p255, %p256
      %s259 = sadd.s32 %s258, 1
      %p262 = scmp.eq.s32.totalorder %s33, 3
      %p263 = scmp.ne.s32.totalorder %s258, %s260
      %p264 = scmp.eq.s32.totalorder %s33, 0
      %p265 = por %p263, %p264
      %p266 = scmp.ne.s32.totalorder %s258, %s260
      %p267 = scmp.eq.s32.totalorder %s38, 3
      %p268 = por %p266, %p267
      %p269 = scmp.ne.s32.totalorder %s260, %s261
      %p270 = scmp.eq.s32.totalorder %s38, 0
      %p271 = por %p269, %p270
      %p272 = scmp.ne.s32.totalorder %s260, %s261
      %p273 = scmp.eq.s32.totalorder %s39, 3
      %p274 = por %p272, %p273
      %p276 = scmp.ne.s32.totalorder %s261, %s275
      %p277 = scmp.eq.s32.totalorder %s39, 0
      %p278 = por %p276, %p277
      %s280 = sadd.s32 %s279, 1
      %p283 = scmp.eq.s32.totalorder %s33, 3
      %p284 = scmp.ne.s32.totalorder %s279, %s281
      %p285 = scmp.eq.s32.totalorder %s33, 0
      %p286 = por %p284, %p285
      %p287 = scmp.ne.s32.totalorder %s279, %s281
      %p288 = scmp.eq.s32.totalorder %s38, 3
      %p289 = por %p287, %p288
      %p290 = scmp.ne.s32.totalorder %s281, %s282
      %p291 = scmp.eq.s32.totalorder %s38, 0
      %p292 = por %p290, %p291
      %p293 = scmp.ne.s32.totalorder %s281, %s282
      %p294 = scmp.eq.s32.totalorder %s39, 3
      %p295 = por %p293, %p294
      %p297 = scmp.ne.s32.totalorder %s282, %s296
      %p298 = scmp.eq.s32.totalorder %s39, 0
      %p299 = por %p297, %p298
      %s301 = sadd.s32 %s300, 1
      %p304 = scmp.eq.s32.totalorder %s33, 3
      %p305 = scmp.ne.s32.totalorder %s300, %s302
      %p306 = scmp.eq.s32.totalorder %s33, 0
      %p307 = por %p305, %p306
      %p308 = scmp.ne.s32.totalorder %s300, %s302
      %p309 = scmp.eq.s32.totalorder %s38, 3
      %p310 = por %p308, %p309
      %p311 = scmp.ne.s32.totalorder %s302, %s303
      %p312 = scmp.eq.s32.totalorder %s38, 0
      %p313 = por %p311, %p312
      %p314 = scmp.ne.s32.totalorder %s302, %s303
      %p315 = scmp.eq.s32.totalorder %s39, 3
      %p316 = por %p314, %p315
      %p318 = scmp.ne.s32.totalorder %s303, %s317
      %p319 = scmp.eq.s32.totalorder %s39, 0
      %p320 = por %p318, %p319
      %s322 = sadd.s32 %s321, 1
      %p325 = scmp.eq.s32.totalorder %s33, 3
      %p326 = scmp.ne.s32.totalorder %s321, %s323
      %p327 = scmp.eq.s32.totalorder %s33, 0
      %p328 = por %p326, %p327
      %p329 = scmp.ne.s32.totalorder %s321, %s323
      %p330 = scmp.eq.s32.totalorder %s38, 3
      %p331 = por %p329, %p330
      %p332 = scmp.ne.s32.totalorder %s323, %s324
      %p333 = scmp.eq.s32.totalorder %s38, 0
      %p334 = por %p332, %p333
      %p335 = scmp.ne.s32.totalorder %s323, %s324
      %p336 = scmp.eq.s32.totalorder %s39, 3
      %p337 = por %p335, %p336
      %p339 = scmp.ne.s32.totalorder %s324, %s338
      %p340 = scmp.eq.s32.totalorder %s39, 0
      %p341 = por %p339, %p340
      %s343 = sadd.s32 %s342, 1
      %p346 = scmp.eq.s32.totalorder %s33, 3
      %p347 = scmp.ne.s32.totalorder %s342, %s344
      %p348 = scmp.eq.s32.totalorder %s33, 0
      %p349 = por %p347, %p348
      %p350 = scmp.ne.s32.totalorder %s342, %s344
      %p351 = scmp.eq.s32.totalorder %s38, 3
      %p352 = por %p350, %p351
      %p353 = scmp.ne.s32.totalorder %s344, %s345
      %p354 = scmp.eq.s32.totalorder %s38, 0
      %p355 = por %p353, %p354
      %p356 = scmp.ne.s32.totalorder %s344, %s345
      %p357 = scmp.eq.s32.totalorder %s39, 3
      %p358 = por %p356, %p357
      %p360 = scmp.ne.s32.totalorder %s345, %s359
      %p361 = scmp.eq.s32.totalorder %s39, 0
      %p362 = por %p360, %p361
      %s363 = ssub.s32 %s40, %s52
      %s364 = ssub.s32 %s41, %s48
      %s365 = sor.u32 %s363, %s364
      %p366 = scmp.eq.s32.totalorder %s365, 0
      %s368 = sadd.s32 %s367, 1
      %s369 = scalar_select %p366, %s367, %s368
      %p372 = pneg %p366
      %p373 = scmp.eq.s32.totalorder %s33, 3
      %p374 = por %p372, %p373
      %p375 = scmp.ne.s32.totalorder %s367, %s370
      %p376 = scmp.eq.s32.totalorder %s33, 0
      %p377 = por %p375, %p376
      %p378 = scmp.ne.s32.totalorder %s367, %s370
      %p379 = scmp.eq.s32.totalorder %s38, 3
      %p380 = por %p378, %p379
      %p381 = scmp.ne.s32.totalorder %s370, %s371
      %p382 = scmp.eq.s32.totalorder %s38, 0
      %p383 = por %p381, %p382
      %p384 = scmp.ne.s32.totalorder %s370, %s371
      %p385 = scmp.eq.s32.totalorder %s39, 3
      %p386 = por %p384, %p385
      %p388 = scmp.ne.s32.totalorder %s371, %s387
      %p389 = scmp.eq.s32.totalorder %s39, 0
      %p390 = por %p388, %p389
      %p391 = scmp.le.s32.totalorder 1, %s33
      %p392 = scmp.lt.s32.totalorder %s33, 5
      %p393 = pnand %p391, %p392
      %p394 = pneg %p393
      // Predicated region
      $region9: #{tpu_custom_call.1} parent=5 // pred_check
        _
      $region10: #{tpu_custom_call.1} parent=5 // pred_check_branch
        %396 = sbr.rel (%p393) target = $region12
      $region11: #{tpu_custom_call.1} parent=5 // pred_region
        %s397 = ssub.s32 %s33, 1
        // Predicated region
        $region13: #{tpu_custom_call.1} parent=11 // pred_check
          %p398 = pneg %p166
        $region14: #{tpu_custom_call.1} parent=11 // pred_check_branch
          %400 = sbr.rel (%p398) target = $region16
        $region15: #{tpu_custom_call.1} parent=11 // pred_region
          %s402 = ssub.s32 192, 192
          %403 = vsyncadd [#allocation11], %s402
          %s404 = sshll.u32 [#allocation10], 4
          %s405 = int_to_ptr.vmem [resolvable:$true] %s404
          %410 = dma.hbm_to_vmem [thread:$0]  %s3, 192, %s405, [#allocation11], 64, 64, 4
        $region16: #{tpu_custom_call.1} parent=11 // pred_fallthru
          _
        // Predicated region
        $region17: #{tpu_custom_call.1} parent=11 // pred_check
          %p411 = pneg %p187
        $region18: #{tpu_custom_call.1} parent=11 // pred_check_branch
          %413 = sbr.rel (%p411) target = $region20
        $region19: #{tpu_custom_call.1} parent=11 // pred_region
          %s415 = ssub.s32 16, 16
          %416 = vsyncadd [#allocation11], %s415
          %s418 = sshll.u32 [#allocation12], 4
          %s419 = int_to_ptr.vmem [resolvable:$true] %s418
          %421 = dma.hbm_to_vmem [thread:$0]  %s4, 16, %s419, [#allocation11]
        $region20: #{tpu_custom_call.1} parent=11 // pred_fallthru
          _
        // Predicated region
        $region21: #{tpu_custom_call.1} parent=11 // pred_check
          %p422 = pneg %p208
        $region22: #{tpu_custom_call.1} parent=11 // pred_check_branch
          %424 = sbr.rel (%p422) target = $region24
        $region23: #{tpu_custom_call.1} parent=11 // pred_region
          %s426 = ssub.s32 1024, 1024
          %427 = vsyncadd [#allocation14], %s426
          %s428 = sshll.u32 [#allocation13], 4
          %s429 = int_to_ptr.vmem [resolvable:$true] %s428
          %434 = dma.hbm_to_vmem [thread:$0]  %s5, 1024, %s429, [#allocation14], 64, 64, 4
        $region24: #{tpu_custom_call.1} parent=11 // pred_fallthru
          _
        // Predicated region
        $region25: #{tpu_custom_call.1} parent=11 // pred_check
          %p435 = pneg %p229
        $region26: #{tpu_custom_call.1} parent=11 // pred_check_branch
          %437 = sbr.rel (%p435) target = $region28
        $region27: #{tpu_custom_call.1} parent=11 // pred_region
          %s439 = ssub.s32 16, 16
          %440 = vsyncadd [#allocation14], %s439
          %s442 = sshll.u32 [#allocation15], 4
          %s443 = int_to_ptr.vmem [resolvable:$true] %s442
          %445 = dma.hbm_to_vmem [thread:$0]  %s6, 16, %s443, [#allocation14]
        $region28: #{tpu_custom_call.1} parent=11 // pred_fallthru
          _
        // Predicated region
        $region29: #{tpu_custom_call.1} parent=11 // pred_check
          %p446 = pneg %p250
        $region30: #{tpu_custom_call.1} parent=11 // pred_check_branch
          %448 = sbr.rel (%p446) target = $region32
        $region31: #{tpu_custom_call.1} parent=11 // pred_region
          %s450 = ssub.s32 192, 192
          %451 = vsyncadd [#allocation17], %s450
          %s452 = sshll.u32 [#allocation16], 4
          %s453 = int_to_ptr.vmem [resolvable:$true] %s452
          %458 = dma.hbm_to_vmem [thread:$0]  %s7, 192, %s453, [#allocation17], 64, 64, 4
        $region32: #{tpu_custom_call.1} parent=11 // pred_fallthru
          _
        // Predicated region
        $region33: #{tpu_custom_call.1} parent=11 // pred_check
          %p459 = pneg %p271
        $region34: #{tpu_custom_call.1} parent=11 // pred_check_branch
          %461 = sbr.rel (%p459) target = $region36
        $region35: #{tpu_custom_call.1} parent=11 // pred_region
          %s463 = ssub.s32 16, 16
          %464 = vsyncadd [#allocation17], %s463
          %s466 = sshll.u32 [#allocation18], 4
          %s467 = int_to_ptr.vmem [resolvable:$true] %s466
          %469 = dma.hbm_to_vmem [thread:$0]  %s8, 16, %s467, [#allocation17]
        $region36: #{tpu_custom_call.1} parent=11 // pred_fallthru
          _
        // Predicated region
        $region37: #{tpu_custom_call.1} parent=11 // pred_check
          %p470 = pneg %p292
        $region38: #{tpu_custom_call.1} parent=11 // pred_check_branch
          %472 = sbr.rel (%p470) target = $region40
        $region39: #{tpu_custom_call.1} parent=11 // pred_region
          %s474 = ssub.s32 1024, 1024
          %475 = vsyncadd [#allocation20], %s474
          %s476 = sshll.u32 [#allocation19], 4
          %s477 = int_to_ptr.vmem [resolvable:$true] %s476
          %482 = dma.hbm_to_vmem [thread:$0]  %s9, 1024, %s477, [#allocation20], 64, 64, 4
        $region40: #{tpu_custom_call.1} parent=11 // pred_fallthru
          _
        // Predicated region
        $region41: #{tpu_custom_call.1} parent=11 // pred_check
          %p483 = pneg %p313
        $region42: #{tpu_custom_call.1} parent=11 // pred_check_branch
          %485 = sbr.rel (%p483) target = $region44
        $region43: #{tpu_custom_call.1} parent=11 // pred_region
          %s487 = ssub.s32 16, 16
          %488 = vsyncadd [#allocation20], %s487
          %s490 = sshll.u32 [#allocation21], 4
          %s491 = int_to_ptr.vmem [resolvable:$true] %s490
          %493 = dma.hbm_to_vmem [thread:$0]  %s10, 16, %s491, [#allocation20]
        $region44: #{tpu_custom_call.1} parent=11 // pred_fallthru
          _
        // Predicated region
        $region45: #{tpu_custom_call.1} parent=11 // pred_check
          %p494 = pneg %p334
        $region46: #{tpu_custom_call.1} parent=11 // pred_check_branch
          %496 = sbr.rel (%p494) target = $region48
        $region47: #{tpu_custom_call.1} parent=11 // pred_region
          %s498 = ssub.s32 64, 64
          %499 = vsyncadd [#allocation23], %s498
          %s501 = sshll.u32 [#allocation22], 4
          %s502 = int_to_ptr.vmem [resolvable:$true] %s501
          %504 = dma.hbm_to_vmem [thread:$0]  %s11, 64, %s502, [#allocation23]
        $region48: #{tpu_custom_call.1} parent=11 // pred_fallthru
          _
        // Predicated region
        $region49: #{tpu_custom_call.1} parent=11 // pred_check
          %p505 = pneg %p355
        $region50: #{tpu_custom_call.1} parent=11 // pred_check_branch
          %507 = sbr.rel (%p505) target = $region52
        $region51: #{tpu_custom_call.1} parent=11 // pred_region
          %s509 = ssub.s32 128, 128
          %510 = vsyncadd [#allocation23], %s509
          %s512 = sshll.u32 [#allocation24], 4
          %s513 = int_to_ptr.vmem [resolvable:$true] %s512
          %515 = dma.hbm_to_vmem [thread:$0]  %s12, 128, %s513, [#allocation23]
        $region52: #{tpu_custom_call.1} parent=11 // pred_fallthru
          _
      $region12: #{tpu_custom_call.1} parent=5 // pred_fallthru
        _
      %p516 = scmp.lt.s32.totalorder %s33, 4
      // Predicated region
      $region53: #{tpu_custom_call.1} parent=5 // pred_check
        %p517 = pneg %p516
      $region54: #{tpu_custom_call.1} parent=5 // pred_check_branch
        %519 = sbr.rel (%p517) target = $region56
      $region55: #{tpu_custom_call.1} parent=5 // pred_region
        // Predicated region
        $region57: #{tpu_custom_call.1} parent=55 // pred_check
          %p520 = pneg %p67
        $region58: #{tpu_custom_call.1} parent=55 // pred_check_branch
          %522 = sbr.rel (%p520) target = $region60
        $region59: #{tpu_custom_call.1} parent=55 // pred_region
          %s523 = sand.u32 %s57, 1
          %s524 = scalar_lea.sflag [#allocation5], %s523
          %s525 = sand.u32 %s57, 1
          %s526 = smul.addr %s525, 64
          %s527 = scalar_lea.vmem [#allocation4], %s526
          %s528 = smul.u32 8, %s41
          %s530 = ssub.s32 1024, 1024
          %531 = vsyncadd %s524, %s530
          %s532 = smul.addr %s528, 2
          %s533 = smul.addr %s40, 32
          %s534 = sadd.s32 %s532, %s533
          %s535 = smul.addr %s534, 64
          %s536 = scalar_lea.hbm %s0, %s535
          %s537 = sshll.u32 %s527, 4
          %s538 = int_to_ptr.vmem [resolvable:$true] %s537
          %543 = dma.hbm_to_vmem [thread:$0]  %s536, 1024, %s538, %s524, 64, 64, 4
        $region60: #{tpu_custom_call.1} parent=55 // pred_fallthru
          _
        // Predicated region
        $region61: #{tpu_custom_call.1} parent=55 // pred_check
          %p544 = pneg %p103
        $region62: #{tpu_custom_call.1} parent=55 // pred_check_branch
          %546 = sbr.rel (%p544) target = $region64
        $region63: #{tpu_custom_call.1} parent=55 // pred_region
          %s547 = sand.u32 %s33, 1
          %s548 = scalar_lea.sflag [#allocation8], %s547
          %s549 = sand.u32 %s93, 1
          %s550 = smul.addr %s549, 16
          %s551 = scalar_lea.vmem [#allocation7], %s550
          %s552 = smul.u32 %s41, 4
          %s553 = ssub.s32 %s552, 1
          %p554 = scmp.gt.s32.totalorder %s553, 0
          %s555 = scalar_select %p554, %s553, 0
          %s556 = smul.u32 2, %s555
          %s558 = ssub.s32 256, 256
          %559 = vsyncadd %s548, %s558
          %s560 = smul.addr %s556, 2
          %s561 = smul.addr %s40, 32
          %s562 = sadd.s32 %s560, %s561
          %s563 = smul.addr %s562, 64
          %s564 = scalar_lea.hbm %s1, %s563
          %s565 = sshll.u32 %s551, 4
          %s566 = int_to_ptr.vmem [resolvable:$true] %s565
          %571 = dma.hbm_to_vmem [thread:$0]  %s564, 256, %s566, %s548, 64, 64, 4
        $region64: #{tpu_custom_call.1} parent=55 // pred_fallthru
          _
        // Predicated region
        $region65: #{tpu_custom_call.1} parent=55 // pred_check
          %p572 = pneg %p139
        $region66: #{tpu_custom_call.1} parent=55 // pred_check_branch
          %574 = sbr.rel (%p572) target = $region68
        $region67: #{tpu_custom_call.1} parent=55 // pred_region
          %s575 = sand.u32 %s33, 1
          %s576 = scalar_lea.sflag [#allocation8], %s575
          %s577 = sand.u32 %s129, 1
          %s578 = smul.addr %s577, 16
          %s579 = scalar_lea.vmem [#allocation9], %s578
          %s580 = sadd.s32 %s41, 1
          %s581 = smul.u32 %s580, 4
          %p582 = scmp.lt.s32.totalorder %s581, 7
          %s583 = scalar_select %p582, %s581, 7
          %s584 = smul.u32 2, %s583
          %s586 = ssub.s32 256, 256
          %587 = vsyncadd %s576, %s586
          %s588 = smul.addr %s584, 2
          %s589 = smul.addr %s40, 32
          %s590 = sadd.s32 %s588, %s589
          %s591 = smul.addr %s590, 64
          %s592 = scalar_lea.hbm %s2, %s591
          %s593 = sshll.u32 %s579, 4
          %s594 = int_to_ptr.vmem [resolvable:$true] %s593
          %599 = dma.hbm_to_vmem [thread:$0]  %s592, 256, %s594, %s576, 64, 64, 4
        $region68: #{tpu_custom_call.1} parent=55 // pred_fallthru
          _
      $region56: #{tpu_custom_call.1} parent=5 // pred_fallthru
        _
      %p600 = scmp.le.s32.totalorder 1, %s33
      %p601 = scmp.lt.s32.totalorder %s33, 5
      %p602 = pnand %p600, %p601
      %p603 = pneg %p602
      // Predicated region
      $region69: #{tpu_custom_call.1} parent=5 // pred_check
        _
      $region70: #{tpu_custom_call.1} parent=5 // pred_check_branch
        %605 = sbr.rel (%p602) target = $region72
      $region71: #{tpu_custom_call.1} parent=5 // pred_region
        %s606 = ssub.s32 %s33, 1
        %s607 = sand.u32 %s60, 1
        %s608 = scalar_lea.sflag [#allocation5], %s607
        %s609 = sand.u32 %s60, 1
        %s610 = smul.addr %s609, 64
        %s611 = scalar_lea.vmem [#allocation4], %s610
        // Predicated region
        $region73: #{tpu_custom_call.1} parent=71 // pred_check
          %p612 = pneg %p73
        $region74: #{tpu_custom_call.1} parent=71 // pred_check_branch
          %614 = sbr.rel (%p612) target = $region76
        $region75: #{tpu_custom_call.1} parent=71 // pred_region
          %615 = dma.done %s608, 1024
        $region76: #{tpu_custom_call.1} parent=71 // pred_fallthru
          _
        %s616 = sand.u32 %s38, 1
        %s617 = scalar_lea.sflag [#allocation8], %s616
        %s618 = sand.u32 %s96, 1
        %s619 = smul.addr %s618, 16
        %s620 = scalar_lea.vmem [#allocation7], %s619
        // Predicated region
        $region77: #{tpu_custom_call.1} parent=71 // pred_check
          %p621 = pneg %p109
        $region78: #{tpu_custom_call.1} parent=71 // pred_check_branch
          %623 = sbr.rel (%p621) target = $region80
        $region79: #{tpu_custom_call.1} parent=71 // pred_region
          %624 = dma.done %s617, 256
        $region80: #{tpu_custom_call.1} parent=71 // pred_fallthru
          _
        %s625 = sand.u32 %s38, 1
        %s626 = scalar_lea.sflag [#allocation8], %s625
        %s627 = sand.u32 %s132, 1
        %s628 = smul.addr %s627, 16
        %s629 = scalar_lea.vmem [#allocation9], %s628
        // Predicated region
        $region81: #{tpu_custom_call.1} parent=71 // pred_check
          %p630 = pneg %p145
        $region82: #{tpu_custom_call.1} parent=71 // pred_check_branch
          %632 = sbr.rel (%p630) target = $region84
        $region83: #{tpu_custom_call.1} parent=71 // pred_region
          %633 = dma.done %s626, 256
        $region84: #{tpu_custom_call.1} parent=71 // pred_fallthru
          _
        // Predicated region
        $region85: #{tpu_custom_call.1} parent=71 // pred_check
          %p634 = pneg %p166
        $region86: #{tpu_custom_call.1} parent=71 // pred_check_branch
          %636 = sbr.rel (%p634) target = $region88
        $region87: #{tpu_custom_call.1} parent=71 // pred_region
          %637 = dma.done [#allocation11], 192
        $region88: #{tpu_custom_call.1} parent=71 // pred_fallthru
          _
        // Predicated region
        $region89: #{tpu_custom_call.1} parent=71 // pred_check
          %p638 = pneg %p187
        $region90: #{tpu_custom_call.1} parent=71 // pred_check_branch
          %640 = sbr.rel (%p638) target = $region92
        $region91: #{tpu_custom_call.1} parent=71 // pred_region
          %641 = dma.done [#allocation11], 16
        $region92: #{tpu_custom_call.1} parent=71 // pred_fallthru
          _
        // Predicated region
        $region93: #{tpu_custom_call.1} parent=71 // pred_check
          %p642 = pneg %p208
        $region94: #{tpu_custom_call.1} parent=71 // pred_check_branch
          %644 = sbr.rel (%p642) target = $region96
        $region95: #{tpu_custom_call.1} parent=71 // pred_region
          %645 = dma.done [#allocation14], 1024
        $region96: #{tpu_custom_call.1} parent=71 // pred_fallthru
          _
        // Predicated region
        $region97: #{tpu_custom_call.1} parent=71 // pred_check
          %p646 = pneg %p229
        $region98: #{tpu_custom_call.1} parent=71 // pred_check_branch
          %648 = sbr.rel (%p646) target = $region100
        $region99: #{tpu_custom_call.1} parent=71 // pred_region
          %649 = dma.done [#allocation14], 16
        $region100: #{tpu_custom_call.1} parent=71 // pred_fallthru
          _
        // Predicated region
        $region101: #{tpu_custom_call.1} parent=71 // pred_check
          %p650 = pneg %p250
        $region102: #{tpu_custom_call.1} parent=71 // pred_check_branch
          %652 = sbr.rel (%p650) target = $region104
        $region103: #{tpu_custom_call.1} parent=71 // pred_region
          %653 = dma.done [#allocation17], 192
        $region104: #{tpu_custom_call.1} parent=71 // pred_fallthru
          _
        // Predicated region
        $region105: #{tpu_custom_call.1} parent=71 // pred_check
          %p654 = pneg %p271
        $region106: #{tpu_custom_call.1} parent=71 // pred_check_branch
          %656 = sbr.rel (%p654) target = $region108
        $region107: #{tpu_custom_call.1} parent=71 // pred_region
          %657 = dma.done [#allocation17], 16
        $region108: #{tpu_custom_call.1} parent=71 // pred_fallthru
          _
        // Predicated region
        $region109: #{tpu_custom_call.1} parent=71 // pred_check
          %p658 = pneg %p292
        $region110: #{tpu_custom_call.1} parent=71 // pred_check_branch
          %660 = sbr.rel (%p658) target = $region112
        $region111: #{tpu_custom_call.1} parent=71 // pred_region
          %661 = dma.done [#allocation20], 1024
        $region112: #{tpu_custom_call.1} parent=71 // pred_fallthru
          _
        // Predicated region
        $region113: #{tpu_custom_call.1} parent=71 // pred_check
          %p662 = pneg %p313
        $region114: #{tpu_custom_call.1} parent=71 // pred_check_branch
          %664 = sbr.rel (%p662) target = $region116
        $region115: #{tpu_custom_call.1} parent=71 // pred_region
          %665 = dma.done [#allocation20], 16
        $region116: #{tpu_custom_call.1} parent=71 // pred_fallthru
          _
        // Predicated region
        $region117: #{tpu_custom_call.1} parent=71 // pred_check
          %p666 = pneg %p334
        $region118: #{tpu_custom_call.1} parent=71 // pred_check_branch
          %668 = sbr.rel (%p666) target = $region120
        $region119: #{tpu_custom_call.1} parent=71 // pred_region
          %669 = dma.done [#allocation23], 64
        $region120: #{tpu_custom_call.1} parent=71 // pred_fallthru
          _
        // Predicated region
        $region121: #{tpu_custom_call.1} parent=71 // pred_check
          %p670 = pneg %p355
        $region122: #{tpu_custom_call.1} parent=71 // pred_check_branch
          %672 = sbr.rel (%p670) target = $region124
        $region123: #{tpu_custom_call.1} parent=71 // pred_region
          %673 = dma.done [#allocation23], 128
        $region124: #{tpu_custom_call.1} parent=71 // pred_fallthru
          _
        %s674 = sand.u32 %s60, 1
        %s675 = scalar_lea.sflag [#allocation5], %s674
        %s676 = sand.u32 %s60, 1
        %s677 = smul.addr %s676, 64
        %s678 = scalar_lea.vmem [#allocation4], %s677
        %p679 = pneg %p73
        %p680 = pneg %p70
        %s681 = sand.u32 %s38, 1
        %s682 = scalar_lea.sflag [#allocation8], %s681
        %s683 = sand.u32 %s96, 1
        %s684 = smul.addr %s683, 16
        %s685 = scalar_lea.vmem [#allocation7], %s684
        %p686 = pneg %p109
        %p687 = pneg %p106
        %s688 = sand.u32 %s38, 1
        %s689 = scalar_lea.sflag [#allocation8], %s688
        %s690 = sand.u32 %s132, 1
        %s691 = smul.addr %s690, 16
        %s692 = scalar_lea.vmem [#allocation9], %s691
        %p693 = pneg %p145
        %p694 = pneg %p142
        %p695 = pneg %p166
        %p696 = pneg %p163
        %p697 = pneg %p187
        %p698 = pneg %p184
        %p699 = pneg %p208
        %p700 = pneg %p205
        %p701 = pneg %p229
        %p702 = pneg %p226
        %p703 = pneg %p250
        %p704 = pneg %p247
        %p705 = pneg %p271
        %p706 = pneg %p268
        %p707 = pneg %p292
        %p708 = pneg %p289
        %p709 = pneg %p313
        %p710 = pneg %p310
        %p711 = pneg %p334
        %p712 = pneg %p331
        %p713 = pneg %p355
        %p714 = pneg %p352
        %p715 = pneg %p383
        %p716 = pneg %p380
        %s717 = sand.u32 %s370, 1
        %s718 = scalar_lea.sflag [#allocation6], %s717
        %s719 = sand.u32 %s370, 1
        %s720 = smul.addr %s719, 8
        %s721 = scalar_lea.vmem [#allocation25], %s720
        %s722 = smul.u32 8, %s43
        %s723 = smul.u32 %s43, 4
        %s724 = ssub.s32 %s723, 1
        %p725 = scmp.gt.s32.totalorder %s724, 0
        %s726 = scalar_select %p725, %s724, 0
        %s727 = smul.u32 2, %s726
        %s728 = sadd.s32 %s43, 1
        %s729 = smul.u32 %s728, 4
        %p730 = scmp.lt.s32.totalorder %s729, 7
        %s731 = scalar_select %p730, %s729, 7
        %s732 = smul.u32 2, %s731
        %734 = vst [vmem:[#allocation2 + $0x7] sm:$0x1] 0.0
        %735 = vst [vmem:[#allocation2 + $0x27] sm:$0x1] 0.0
        %736 = vst [vmem:[#allocation2 + $0x47] sm:$0x1] 0.0
        %737 = vst [vmem:[#allocation2 + $0x67] sm:$0x1] 0.0
        %738 = vst [vmem:[#allocation2 + $0x87] sm:$0x1] 0.0
        %739 = vst [vmem:[#allocation2 + $0xa7] sm:$0x1] 0.0
        %740 = vst [vmem:[#allocation2 + $0xc7] sm:$0x1] 0.0
        %741 = vst [vmem:[#allocation2 + $0xe7] sm:$0x1] 0.0
        %742 = vst [vmem:[#allocation2 + $0x107] sm:$0x1] 0.0
        %743 = vst [vmem:[#allocation2 + $0x127] sm:$0x1] 0.0
        %744 = vst [vmem:[#allocation2 + $0x147] sm:$0x1] 0.0
        %745 = vst [vmem:[#allocation2 + $0x167] sm:$0x1] 0.0
        %746 = vst [vmem:[#allocation2 + $0x18] sm:$0x1] 0.0
        %747 = vst [vmem:[#allocation2 + $0x38] sm:$0x1] 0.0
        %748 = vst [vmem:[#allocation2 + $0x58] sm:$0x1] 0.0
        %749 = vst [vmem:[#allocation2 + $0x78] sm:$0x1] 0.0
        %750 = vst [vmem:[#allocation2 + $0x98] sm:$0x1] 0.0
        %751 = vst [vmem:[#allocation2 + $0xb8] sm:$0x1] 0.0
        %752 = vst [vmem:[#allocation2 + $0xd8] sm:$0x1] 0.0
        %753 = vst [vmem:[#allocation2 + $0xf8] sm:$0x1] 0.0
        %754 = vst [vmem:[#allocation2 + $0x118] sm:$0x1] 0.0
        %755 = vst [vmem:[#allocation2 + $0x138] sm:$0x1] 0.0
        %756 = vst [vmem:[#allocation2 + $0x158] sm:$0x1] 0.0
        %757 = vst [vmem:[#allocation2 + $0x178] sm:$0x1] 0.0
        %v758 = vld [vmem:[%s611] sm:$0xf]
        %v759 = vld [vmem:[%s611 + $0x4] sm:$0xf]
        %v760 = vld [vmem:[%s611 + $0x8] sm:$0xf]
        %v761 = vld [vmem:[%s611 + $0xc] sm:$0xf]
        %v762 = vld [vmem:[%s611 + $0x10] sm:$0xf]
        %v763 = vld [vmem:[%s611 + $0x14] sm:$0xf]
        %v764 = vld [vmem:[%s611 + $0x18] sm:$0xf]
        %v765 = vld [vmem:[%s611 + $0x1c] sm:$0xf]
        %v766 = vld [vmem:[%s611 + $0x20] sm:$0xf]
        %v767 = vld [vmem:[%s611 + $0x24] sm:$0xf]
        %v768 = vld [vmem:[%s611 + $0x28] sm:$0xf]
        %v769 = vld [vmem:[%s611 + $0x2c] sm:$0xf]
        %v770 = vld [vmem:[%s611 + $0x30] sm:$0xf]
        %v771 = vld [vmem:[%s611 + $0x34] sm:$0xf]
        %v772 = vld [vmem:[%s611 + $0x38] sm:$0xf]
        %v773 = vld [vmem:[%s611 + $0x3c] sm:$0xf]
        %v774 = vunpack.c.l.bf16 %v758
        %v775 = vunpack.c.l.bf16 %v759
        %v776 = vunpack.c.l.bf16 %v760
        %v777 = vunpack.c.l.bf16 %v761
        %v778 = vunpack.c.l.bf16 %v762
        %v779 = vunpack.c.l.bf16 %v763
        %v780 = vunpack.c.l.bf16 %v764
        %v781 = vunpack.c.l.bf16 %v765
        %v782 = vunpack.c.l.bf16 %v766
        %v783 = vunpack.c.l.bf16 %v767
        %v784 = vunpack.c.l.bf16 %v768
        %v785 = vunpack.c.l.bf16 %v769
        %v786 = vunpack.c.l.bf16 %v770
        %v787 = vunpack.c.l.bf16 %v771
        %v788 = vunpack.c.l.bf16 %v772
        %v789 = vunpack.c.l.bf16 %v773
        %s790 = scalar_lea.vmem [#allocation2], 64
        %791 = vst [vmem:[%s790 + $0x8] sm:$0xff] %v774
        %792 = vst [vmem:[%s790 + $0x10] sm:$0xff] %v775
        %793 = vst [vmem:[%s790 + $0x28] sm:$0xff] %v776
        %794 = vst [vmem:[%s790 + $0x30] sm:$0xff] %v777
        %795 = vst [vmem:[%s790 + $0x48] sm:$0xff] %v778
        %796 = vst [vmem:[%s790 + $0x50] sm:$0xff] %v779
        %797 = vst [vmem:[%s790 + $0x68] sm:$0xff] %v780
        %798 = vst [vmem:[%s790 + $0x70] sm:$0xff] %v781
        %799 = vst [vmem:[%s790 + $0x88] sm:$0xff] %v782
        %800 = vst [vmem:[%s790 + $0x90] sm:$0xff] %v783
        %801 = vst [vmem:[%s790 + $0xa8] sm:$0xff] %v784
        %802 = vst [vmem:[%s790 + $0xb0] sm:$0xff] %v785
        %803 = vst [vmem:[%s790 + $0xc8] sm:$0xff] %v786
        %804 = vst [vmem:[%s790 + $0xd0] sm:$0xff] %v787
        %805 = vst [vmem:[%s790 + $0xe8] sm:$0xff] %v788
        %806 = vst [vmem:[%s790 + $0xf0] sm:$0xff] %v789
        %p807 = scmp.gt.s32.totalorder %s43, 0
        %s808 = scalar_select %p807, 1, 0
        %s809 = scvt.s32.f32 %s808
        %v810 = vld [vmem:[%s620] sm:$0xf]
        %v811 = vld [vmem:[%s620 + $0x4] sm:$0xf]
        %v812 = vld [vmem:[%s620 + $0x8] sm:$0xf]
        %v813 = vld [vmem:[%s620 + $0xc] sm:$0xf]
        %v814 = vunpack.c.l.bf16 %v810
        %v815 = vunpack.c.l.bf16 %v811
        %v816 = vunpack.c.l.bf16 %v812
        %v817 = vunpack.c.l.bf16 %v813
        %v818 = vstv %s809
        %v819 = vmul.f32 %v814, %v818
        %v820 = vmul.f32 %v815, %v818
        %v821 = vmul.f32 %v816, %v818
        %v822 = vmul.f32 %v817, %v818
        %823 = vst [vmem:[#allocation2 + $0x8] sm:$0xff] %v819
        %824 = vst [vmem:[#allocation2 + $0x10] sm:$0xff] %v820
        %825 = vst [vmem:[#allocation2 + $0x28] sm:$0xff] %v821
        %826 = vst [vmem:[#allocation2 + $0x30] sm:$0xff] %v822
        %p827 = scmp.lt.s32.totalorder %s43, 1
        %s828 = scalar_select %p827, 1, 0
        %s829 = scvt.s32.f32 %s828
        %v830 = vld [vmem:[%s629] sm:$0xf]
        %v831 = vld [vmem:[%s629 + $0x4] sm:$0xf]
        %v832 = vld [vmem:[%s629 + $0x8] sm:$0xf]
        %v833 = vld [vmem:[%s629 + $0xc] sm:$0xf]
        %v834 = vunpack.c.l.bf16 %v830
        %v835 = vunpack.c.l.bf16 %v831
        %v836 = vunpack.c.l.bf16 %v832
        %v837 = vunpack.c.l.bf16 %v833
        %v838 = vstv %s829
        %v839 = vmul.f32 %v834, %v838
        %v840 = vmul.f32 %v835, %v838
        %v841 = vmul.f32 %v836, %v838
        %v842 = vmul.f32 %v837, %v838
        %s843 = scalar_lea.vmem [#allocation2], 320
        %844 = vst [vmem:[%s843 + $0x8] sm:$0xff] %v839
        %845 = vst [vmem:[%s843 + $0x10] sm:$0xff] %v840
        %846 = vst [vmem:[%s843 + $0x28] sm:$0xff] %v841
        %847 = vst [vmem:[%s843 + $0x30] sm:$0xff] %v842
        %v848 = vld [vmem:[#allocation10] sm:$0x7]
        %v849 = vld [vmem:[#allocation10 + $0x4] sm:$0x7]
        %v850 = vld [vmem:[#allocation10 + $0x8] sm:$0x7]
        %v851 = vld [vmem:[#allocation12] sm:$0x1]
        %v852 = vld [vmem:[#allocation2 + $0x7] sm:$0xff]
        %v853 = vld [vmem:[#allocation2 + $0xf] sm:$0xff]
        %v854 = vld [vmem:[#allocation2 + $0x27] sm:$0xff]
        %v855 = vld [vmem:[#allocation2 + $0x2f] sm:$0xff]
        %v856 = vld [vmem:[#allocation2 + $0x47] sm:$0xff]
        %v857 = vld [vmem:[#allocation2 + $0x4f] sm:$0xff]
        %v858 = vld [vmem:[#allocation2 + $0x67] sm:$0xff]
        %v859 = vld [vmem:[#allocation2 + $0x6f] sm:$0xff]
        %v860 = vld [vmem:[#allocation2 + $0x87] sm:$0xff]
        %v861 = vld [vmem:[#allocation2 + $0x8f] sm:$0xff]
        %v862 = vld [vmem:[#allocation2 + $0xa7] sm:$0xff]
        %v863 = vld [vmem:[#allocation2 + $0xaf] sm:$0xff]
        %v864 = vld [vmem:[#allocation2 + $0xc7] sm:$0xff]
        %v865 = vld [vmem:[#allocation2 + $0xcf] sm:$0xff]
        %v866 = vld [vmem:[#allocation2 + $0xe7] sm:$0xff]
        %v867 = vld [vmem:[#allocation2 + $0xef] sm:$0xff]
        %v868 = vld [vmem:[#allocation2 + $0x107] sm:$0xff]
        %v869 = vld [vmem:[#allocation2 + $0x10f] sm:$0xff]
        %v870 = vld [vmem:[#allocation2 + $0x127] sm:$0xff]
        %v871 = vld [vmem:[#allocation2 + $0x12f] sm:$0xff]
        %v872 = vld [vmem:[#allocation2 + $0x147] sm:$0xff]
        %v873 = vld [vmem:[#allocation2 + $0x14f] sm:$0xff]
        %v874 = vld [vmem:[#allocation2 + $0x167] sm:$0xff]
        %v875 = vld [vmem:[#allocation2 + $0x16f] sm:$0xff]
        %v876 = vlaneseq
        %v877 = vshrl.u32 %v876, 7
        %v878 = vsub.s32 0, %v877
        %v879 = vrot.slane %v848, %v878
        %v880 = vmul.f32 %v852, %v879
        %v881 = vmul.f32 %v853, %v879
        %v882 = vmul.f32 %v854, %v879
        %v883 = vmul.f32 %v855, %v879
        %v884 = vmul.f32 %v856, %v879
        %v885 = vmul.f32 %v857, %v879
        %v886 = vmul.f32 %v858, %v879
        %v887 = vmul.f32 %v859, %v879
        %v888 = vmul.f32 %v860, %v879
        %v889 = vmul.f32 %v861, %v879
        %v890 = vmul.f32 %v862, %v879
        %v891 = vmul.f32 %v863, %v879
        %v892 = vmul.f32 %v864, %v879
        %v893 = vmul.f32 %v865, %v879
        %v894 = vmul.f32 %v866, %v879
        %v895 = vmul.f32 %v867, %v879
        %v896 = vmul.f32 %v868, %v879
        %v897 = vmul.f32 %v869, %v879
        %v898 = vmul.f32 %v870, %v879
        %v899 = vmul.f32 %v871, %v879
        %v900 = vlaneseq
        %v901 = vshrl.u32 %v900, 7
        %v902 = vsub.s32 0, %v901
        %v903 = vrot.slane %v849, %v902
        %v904 = vmul.f32 %v854, %v903
        %v905 = vmul.f32 %v855, %v903
        %v906 = vmul.f32 %v856, %v903
        %v907 = vmul.f32 %v857, %v903
        %v908 = vmul.f32 %v858, %v903
        %v909 = vmul.f32 %v859, %v903
        %v910 = vmul.f32 %v860, %v903
        %v911 = vmul.f32 %v861, %v903
        %v912 = vmul.f32 %v862, %v903
        %v913 = vmul.f32 %v863, %v903
        %v914 = vmul.f32 %v864, %v903
        %v915 = vmul.f32 %v865, %v903
        %v916 = vmul.f32 %v866, %v903
        %v917 = vmul.f32 %v867, %v903
        %v918 = vmul.f32 %v868, %v903
        %v919 = vmul.f32 %v869, %v903
        %v920 = vmul.f32 %v870, %v903
        %v921 = vmul.f32 %v871, %v903
        %v922 = vmul.f32 %v872, %v903
        %v923 = vmul.f32 %v873, %v903
        %v924 = vadd.f32 %v880, %v904
        %v925 = vadd.f32 %v881, %v905
        %v926 = vadd.f32 %v882, %v906
        %v927 = vadd.f32 %v883, %v907
        %v928 = vadd.f32 %v884, %v908
        %v929 = vadd.f32 %v885, %v909
        %v930 = vadd.f32 %v886, %v910
        %v931 = vadd.f32 %v887, %v911
        %v932 = vadd.f32 %v888, %v912
        %v933 = vadd.f32 %v889, %v913
        %v934 = vadd.f32 %v890, %v914
        %v935 = vadd.f32 %v891, %v915
        %v936 = vadd.f32 %v892, %v916
        %v937 = vadd.f32 %v893, %v917
        %v938 = vadd.f32 %v894, %v918
        %v939 = vadd.f32 %v895, %v919
        %v940 = vadd.f32 %v896, %v920
        %v941 = vadd.f32 %v897, %v921
        %v942 = vadd.f32 %v898, %v922
        %v943 = vadd.f32 %v899, %v923
        %v944 = vlaneseq
        %v945 = vshrl.u32 %v944, 7
        %v946 = vsub.s32 0, %v945
        %v947 = vrot.slane %v850, %v946
        %v948 = vmul.f32 %v856, %v947
        %v949 = vmul.f32 %v857, %v947
        %v950 = vmul.f32 %v858, %v947
        %v951 = vmul.f32 %v859, %v947
        %v952 = vmul.f32 %v860, %v947
        %v953 = vmul.f32 %v861, %v947
        %v954 = vmul.f32 %v862, %v947
        %v955 = vmul.f32 %v863, %v947
        %v956 = vmul.f32 %v864, %v947
        %v957 = vmul.f32 %v865, %v947
        %v958 = vmul.f32 %v866, %v947
        %v959 = vmul.f32 %v867, %v947
        %v960 = vmul.f32 %v868, %v947
        %v961 = vmul.f32 %v869, %v947
        %v962 = vmul.f32 %v870, %v947
        %v963 = vmul.f32 %v871, %v947
        %v964 = vmul.f32 %v872, %v947
        %v965 = vmul.f32 %v873, %v947
        %v966 = vmul.f32 %v874, %v947
        %v967 = vmul.f32 %v875, %v947
        %v968 = vadd.f32 %v924, %v948
        %v969 = vadd.f32 %v925, %v949
        %v970 = vadd.f32 %v926, %v950
        %v971 = vadd.f32 %v927, %v951
        %v972 = vadd.f32 %v928, %v952
        %v973 = vadd.f32 %v929, %v953
        %v974 = vadd.f32 %v930, %v954
        %v975 = vadd.f32 %v931, %v955
        %v976 = vadd.f32 %v932, %v956
        %v977 = vadd.f32 %v933, %v957
        %v978 = vadd.f32 %v934, %v958
        %v979 = vadd.f32 %v935, %v959
        %v980 = vadd.f32 %v936, %v960
        %v981 = vadd.f32 %v937, %v961
        %v982 = vadd.f32 %v938, %v962
        %v983 = vadd.f32 %v939, %v963
        %v984 = vadd.f32 %v940, %v964
        %v985 = vadd.f32 %v941, %v965
        %v986 = vadd.f32 %v942, %v966
        %v987 = vadd.f32 %v943, %v967
        %v988 = vld [vmem:[#allocation2 + $0x8] sm:$0xff]
        %v989 = vld [vmem:[#allocation2 + $0x10] sm:$0xff]
        %v990 = vld [vmem:[#allocation2 + $0x28] sm:$0xff]
        %v991 = vld [vmem:[#allocation2 + $0x30] sm:$0xff]
        %v992 = vld [vmem:[#allocation2 + $0x48] sm:$0xff]
        %v993 = vld [vmem:[#allocation2 + $0x50] sm:$0xff]
        %v994 = vld [vmem:[#allocation2 + $0x68] sm:$0xff]
        %v995 = vld [vmem:[#allocation2 + $0x70] sm:$0xff]
        %v996 = vld [vmem:[#allocation2 + $0x88] sm:$0xff]
        %v997 = vld [vmem:[#allocation2 + $0x90] sm:$0xff]
        %v998 = vld [vmem:[#allocation2 + $0xa8] sm:$0xff]
        %v999 = vld [vmem:[#allocation2 + $0xb0] sm:$0xff]
        %v1000 = vld [vmem:[#allocation2 + $0xc8] sm:$0xff]
        %v1001 = vld [vmem:[#allocation2 + $0xd0] sm:$0xff]
        %v1002 = vld [vmem:[#allocation2 + $0xe8] sm:$0xff]
        %v1003 = vld [vmem:[#allocation2 + $0xf0] sm:$0xff]
        %v1004 = vld [vmem:[#allocation2 + $0x108] sm:$0xff]
        %v1005 = vld [vmem:[#allocation2 + $0x110] sm:$0xff]
        %v1006 = vld [vmem:[#allocation2 + $0x128] sm:$0xff]
        %v1007 = vld [vmem:[#allocation2 + $0x130] sm:$0xff]
        %v1008 = vld [vmem:[#allocation2 + $0x148] sm:$0xff]
        %v1009 = vld [vmem:[#allocation2 + $0x150] sm:$0xff]
        %v1010 = vld [vmem:[#allocation2 + $0x168] sm:$0xff]
        %v1011 = vld [vmem:[#allocation2 + $0x170] sm:$0xff]
        %v1012 = vlaneseq
        %v1013 = vshrl.u32 %v1012, 7
        %v1014 = vsub.s32 1, %v1013
        %v1015 = vrot.slane %v848, %v1014
        %v1016 = vmul.f32 %v988, %v1015
        %v1017 = vmul.f32 %v989, %v1015
        %v1018 = vmul.f32 %v990, %v1015
        %v1019 = vmul.f32 %v991, %v1015
        %v1020 = vmul.f32 %v992, %v1015
        %v1021 = vmul.f32 %v993, %v1015
        %v1022 = vmul.f32 %v994, %v1015
        %v1023 = vmul.f32 %v995, %v1015
        %v1024 = vmul.f32 %v996, %v1015
        %v1025 = vmul.f32 %v997, %v1015
        %v1026 = vmul.f32 %v998, %v1015
        %v1027 = vmul.f32 %v999, %v1015
        %v1028 = vmul.f32 %v1000, %v1015
        %v1029 = vmul.f32 %v1001, %v1015
        %v1030 = vmul.f32 %v1002, %v1015
        %v1031 = vmul.f32 %v1003, %v1015
        %v1032 = vmul.f32 %v1004, %v1015
        %v1033 = vmul.f32 %v1005, %v1015
        %v1034 = vmul.f32 %v1006, %v1015
        %v1035 = vmul.f32 %v1007, %v1015
        %v1036 = vadd.f32 %v968, %v1016
        %v1037 = vadd.f32 %v969, %v1017
        %v1038 = vadd.f32 %v970, %v1018
        %v1039 = vadd.f32 %v971, %v1019
        %v1040 = vadd.f32 %v972, %v1020
        %v1041 = vadd.f32 %v973, %v1021
        %v1042 = vadd.f32 %v974, %v1022
        %v1043 = vadd.f32 %v975, %v1023
        %v1044 = vadd.f32 %v976, %v1024
        %v1045 = vadd.f32 %v977, %v1025
        %v1046 = vadd.f32 %v978, %v1026
        %v1047 = vadd.f32 %v979, %v1027
        %v1048 = vadd.f32 %v980, %v1028
        %v1049 = vadd.f32 %v981, %v1029
        %v1050 = vadd.f32 %v982, %v1030
        %v1051 = vadd.f32 %v983, %v1031
        %v1052 = vadd.f32 %v984, %v1032
        %v1053 = vadd.f32 %v985, %v1033
        %v1054 = vadd.f32 %v986, %v1034
        %v1055 = vadd.f32 %v987, %v1035
        %v1056 = vlaneseq
        %v1057 = vshrl.u32 %v1056, 7
        %v1058 = vsub.s32 1, %v1057
        %v1059 = vrot.slane %v849, %v1058
        %v1060 = vmul.f32 %v990, %v1059
        %v1061 = vmul.f32 %v991, %v1059
        %v1062 = vmul.f32 %v992, %v1059
        %v1063 = vmul.f32 %v993, %v1059
        %v1064 = vmul.f32 %v994, %v1059
        %v1065 = vmul.f32 %v995, %v1059
        %v1066 = vmul.f32 %v996, %v1059
        %v1067 = vmul.f32 %v997, %v1059
        %v1068 = vmul.f32 %v998, %v1059
        %v1069 = vmul.f32 %v999, %v1059
        %v1070 = vmul.f32 %v1000, %v1059
        %v1071 = vmul.f32 %v1001, %v1059
        %v1072 = vmul.f32 %v1002, %v1059
        %v1073 = vmul.f32 %v1003, %v1059
        %v1074 = vmul.f32 %v1004, %v1059
        %v1075 = vmul.f32 %v1005, %v1059
        %v1076 = vmul.f32 %v1006, %v1059
        %v1077 = vmul.f32 %v1007, %v1059
        %v1078 = vmul.f32 %v1008, %v1059
        %v1079 = vmul.f32 %v1009, %v1059
        %v1080 = vadd.f32 %v1036, %v1060
        %v1081 = vadd.f32 %v1037, %v1061
        %v1082 = vadd.f32 %v1038, %v1062
        %v1083 = vadd.f32 %v1039, %v1063
        %v1084 = vadd.f32 %v1040, %v1064
        %v1085 = vadd.f32 %v1041, %v1065
        %v1086 = vadd.f32 %v1042, %v1066
        %v1087 = vadd.f32 %v1043, %v1067
        %v1088 = vadd.f32 %v1044, %v1068
        %v1089 = vadd.f32 %v1045, %v1069
        %v1090 = vadd.f32 %v1046, %v1070
        %v1091 = vadd.f32 %v1047, %v1071
        %v1092 = vadd.f32 %v1048, %v1072
        %v1093 = vadd.f32 %v1049, %v1073
        %v1094 = vadd.f32 %v1050, %v1074
        %v1095 = vadd.f32 %v1051, %v1075
        %v1096 = vadd.f32 %v1052, %v1076
        %v1097 = vadd.f32 %v1053, %v1077
        %v1098 = vadd.f32 %v1054, %v1078
        %v1099 = vadd.f32 %v1055, %v1079
        %v1100 = vlaneseq
        %v1101 = vshrl.u32 %v1100, 7
        %v1102 = vsub.s32 1, %v1101
        %v1103 = vrot.slane %v850, %v1102
        %v1104 = vmul.f32 %v992, %v1103
        %v1105 = vmul.f32 %v993, %v1103
        %v1106 = vmul.f32 %v994, %v1103
        %v1107 = vmul.f32 %v995, %v1103
        %v1108 = vmul.f32 %v996, %v1103
        %v1109 = vmul.f32 %v997, %v1103
        %v1110 = vmul.f32 %v998, %v1103
        %v1111 = vmul.f32 %v999, %v1103
        %v1112 = vmul.f32 %v1000, %v1103
        %v1113 = vmul.f32 %v1001, %v1103
        %v1114 = vmul.f32 %v1002, %v1103
        %v1115 = vmul.f32 %v1003, %v1103
        %v1116 = vmul.f32 %v1004, %v1103
        %v1117 = vmul.f32 %v1005, %v1103
        %v1118 = vmul.f32 %v1006, %v1103
        %v1119 = vmul.f32 %v1007, %v1103
        %v1120 = vmul.f32 %v1008, %v1103
        %v1121 = vmul.f32 %v1009, %v1103
        %v1122 = vmul.f32 %v1010, %v1103
        %v1123 = vmul.f32 %v1011, %v1103
        %v1124 = vadd.f32 %v1080, %v1104
        %v1125 = vadd.f32 %v1081, %v1105
        %v1126 = vadd.f32 %v1082, %v1106
        %v1127 = vadd.f32 %v1083, %v1107
        %v1128 = vadd.f32 %v1084, %v1108
        %v1129 = vadd.f32 %v1085, %v1109
        %v1130 = vadd.f32 %v1086, %v1110
        %v1131 = vadd.f32 %v1087, %v1111
        %v1132 = vadd.f32 %v1088, %v1112
        %v1133 = vadd.f32 %v1089, %v1113
        %v1134 = vadd.f32 %v1090, %v1114
        %v1135 = vadd.f32 %v1091, %v1115
        %v1136 = vadd.f32 %v1092, %v1116
        %v1137 = vadd.f32 %v1093, %v1117
        %v1138 = vadd.f32 %v1094, %v1118
        %v1139 = vadd.f32 %v1095, %v1119
        %v1140 = vadd.f32 %v1096, %v1120
        %v1141 = vadd.f32 %v1097, %v1121
        %v1142 = vadd.f32 %v1098, %v1122
        %v1143 = vadd.f32 %v1099, %v1123
        %v1144 = vld [vmem:[#allocation2 + $0x9] sm:$0xff]
        %v1145 = vld [vmem:[#allocation2 + $0x11] sm:$0xff]
        %v1146 = vld [vmem:[#allocation2 + $0x29] sm:$0xff]
        %v1147 = vld [vmem:[#allocation2 + $0x31] sm:$0xff]
        %v1148 = vld [vmem:[#allocation2 + $0x49] sm:$0xff]
        %v1149 = vld [vmem:[#allocation2 + $0x51] sm:$0xff]
        %v1150 = vld [vmem:[#allocation2 + $0x69] sm:$0xff]
        %v1151 = vld [vmem:[#allocation2 + $0x71] sm:$0xff]
        %v1152 = vld [vmem:[#allocation2 + $0x89] sm:$0xff]
        %v1153 = vld [vmem:[#allocation2 + $0x91] sm:$0xff]
        %v1154 = vld [vmem:[#allocation2 + $0xa9] sm:$0xff]
        %v1155 = vld [vmem:[#allocation2 + $0xb1] sm:$0xff]
        %v1156 = vld [vmem:[#allocation2 + $0xc9] sm:$0xff]
        %v1157 = vld [vmem:[#allocation2 + $0xd1] sm:$0xff]
        %v1158 = vld [vmem:[#allocation2 + $0xe9] sm:$0xff]
        %v1159 = vld [vmem:[#allocation2 + $0xf1] sm:$0xff]
        %v1160 = vld [vmem:[#allocation2 + $0x109] sm:$0xff]
        %v1161 = vld [vmem:[#allocation2 + $0x111] sm:$0xff]
        %v1162 = vld [vmem:[#allocation2 + $0x129] sm:$0xff]
        %v1163 = vld [vmem:[#allocation2 + $0x131] sm:$0xff]
        %v1164 = vld [vmem:[#allocation2 + $0x149] sm:$0xff]
        %v1165 = vld [vmem:[#allocation2 + $0x151] sm:$0xff]
        %v1166 = vld [vmem:[#allocation2 + $0x169] sm:$0xff]
        %v1167 = vld [vmem:[#allocation2 + $0x171] sm:$0xff]
        %v1168 = vlaneseq
        %v1169 = vshrl.u32 %v1168, 7
        %v1170 = vsub.s32 2, %v1169
        %v1171 = vrot.slane %v848, %v1170
        %v1172 = vmul.f32 %v1144, %v1171
        %v1173 = vmul.f32 %v1145, %v1171
        %v1174 = vmul.f32 %v1146, %v1171
        %v1175 = vmul.f32 %v1147, %v1171
        %v1176 = vmul.f32 %v1148, %v1171
        %v1177 = vmul.f32 %v1149, %v1171
        %v1178 = vmul.f32 %v1150, %v1171
        %v1179 = vmul.f32 %v1151, %v1171
        %v1180 = vmul.f32 %v1152, %v1171
        %v1181 = vmul.f32 %v1153, %v1171
        %v1182 = vmul.f32 %v1154, %v1171
        %v1183 = vmul.f32 %v1155, %v1171
        %v1184 = vmul.f32 %v1156, %v1171
        %v1185 = vmul.f32 %v1157, %v1171
        %v1186 = vmul.f32 %v1158, %v1171
        %v1187 = vmul.f32 %v1159, %v1171
        %v1188 = vmul.f32 %v1160, %v1171
        %v1189 = vmul.f32 %v1161, %v1171
        %v1190 = vmul.f32 %v1162, %v1171
        %v1191 = vmul.f32 %v1163, %v1171
        %v1192 = vadd.f32 %v1124, %v1172
        %v1193 = vadd.f32 %v1125, %v1173
        %v1194 = vadd.f32 %v1126, %v1174
        %v1195 = vadd.f32 %v1127, %v1175
        %v1196 = vadd.f32 %v1128, %v1176
        %v1197 = vadd.f32 %v1129, %v1177
        %v1198 = vadd.f32 %v1130, %v1178
        %v1199 = vadd.f32 %v1131, %v1179
        %v1200 = vadd.f32 %v1132, %v1180
        %v1201 = vadd.f32 %v1133, %v1181
        %v1202 = vadd.f32 %v1134, %v1182
        %v1203 = vadd.f32 %v1135, %v1183
        %v1204 = vadd.f32 %v1136, %v1184
        %v1205 = vadd.f32 %v1137, %v1185
        %v1206 = vadd.f32 %v1138, %v1186
        %v1207 = vadd.f32 %v1139, %v1187
        %v1208 = vadd.f32 %v1140, %v1188
        %v1209 = vadd.f32 %v1141, %v1189
        %v1210 = vadd.f32 %v1142, %v1190
        %v1211 = vadd.f32 %v1143, %v1191
        %v1212 = vlaneseq
        %v1213 = vshrl.u32 %v1212, 7
        %v1214 = vsub.s32 2, %v1213
        %v1215 = vrot.slane %v849, %v1214
        %v1216 = vmul.f32 %v1146, %v1215
        %v1217 = vmul.f32 %v1147, %v1215
        %v1218 = vmul.f32 %v1148, %v1215
        %v1219 = vmul.f32 %v1149, %v1215
        %v1220 = vmul.f32 %v1150, %v1215
        %v1221 = vmul.f32 %v1151, %v1215
        %v1222 = vmul.f32 %v1152, %v1215
        %v1223 = vmul.f32 %v1153, %v1215
        %v1224 = vmul.f32 %v1154, %v1215
        %v1225 = vmul.f32 %v1155, %v1215
        %v1226 = vmul.f32 %v1156, %v1215
        %v1227 = vmul.f32 %v1157, %v1215
        %v1228 = vmul.f32 %v1158, %v1215
        %v1229 = vmul.f32 %v1159, %v1215
        %v1230 = vmul.f32 %v1160, %v1215
        %v1231 = vmul.f32 %v1161, %v1215
        %v1232 = vmul.f32 %v1162, %v1215
        %v1233 = vmul.f32 %v1163, %v1215
        %v1234 = vmul.f32 %v1164, %v1215
        %v1235 = vmul.f32 %v1165, %v1215
        %v1236 = vadd.f32 %v1192, %v1216
        %v1237 = vadd.f32 %v1193, %v1217
        %v1238 = vadd.f32 %v1194, %v1218
        %v1239 = vadd.f32 %v1195, %v1219
        %v1240 = vadd.f32 %v1196, %v1220
        %v1241 = vadd.f32 %v1197, %v1221
        %v1242 = vadd.f32 %v1198, %v1222
        %v1243 = vadd.f32 %v1199, %v1223
        %v1244 = vadd.f32 %v1200, %v1224
        %v1245 = vadd.f32 %v1201, %v1225
        %v1246 = vadd.f32 %v1202, %v1226
        %v1247 = vadd.f32 %v1203, %v1227
        %v1248 = vadd.f32 %v1204, %v1228
        %v1249 = vadd.f32 %v1205, %v1229
        %v1250 = vadd.f32 %v1206, %v1230
        %v1251 = vadd.f32 %v1207, %v1231
        %v1252 = vadd.f32 %v1208, %v1232
        %v1253 = vadd.f32 %v1209, %v1233
        %v1254 = vadd.f32 %v1210, %v1234
        %v1255 = vadd.f32 %v1211, %v1235
        %v1256 = vlaneseq
        %v1257 = vshrl.u32 %v1256, 7
        %v1258 = vsub.s32 2, %v1257
        %v1259 = vrot.slane %v850, %v1258
        %v1260 = vmul.f32 %v1148, %v1259
        %v1261 = vmul.f32 %v1149, %v1259
        %v1262 = vmul.f32 %v1150, %v1259
        %v1263 = vmul.f32 %v1151, %v1259
        %v1264 = vmul.f32 %v1152, %v1259
        %v1265 = vmul.f32 %v1153, %v1259
        %v1266 = vmul.f32 %v1154, %v1259
        %v1267 = vmul.f32 %v1155, %v1259
        %v1268 = vmul.f32 %v1156, %v1259
        %v1269 = vmul.f32 %v1157, %v1259
        %v1270 = vmul.f32 %v1158, %v1259
        %v1271 = vmul.f32 %v1159, %v1259
        %v1272 = vmul.f32 %v1160, %v1259
        %v1273 = vmul.f32 %v1161, %v1259
        %v1274 = vmul.f32 %v1162, %v1259
        %v1275 = vmul.f32 %v1163, %v1259
        %v1276 = vmul.f32 %v1164, %v1259
        %v1277 = vmul.f32 %v1165, %v1259
        %v1278 = vmul.f32 %v1166, %v1259
        %v1279 = vmul.f32 %v1167, %v1259
        %v1280 = vadd.f32 %v1236, %v1260
        %v1281 = vadd.f32 %v1237, %v1261
        %v1282 = vadd.f32 %v1238, %v1262
        %v1283 = vadd.f32 %v1239, %v1263
        %v1284 = vadd.f32 %v1240, %v1264
        %v1285 = vadd.f32 %v1241, %v1265
        %v1286 = vadd.f32 %v1242, %v1266
        %v1287 = vadd.f32 %v1243, %v1267
        %v1288 = vadd.f32 %v1244, %v1268
        %v1289 = vadd.f32 %v1245, %v1269
        %v1290 = vadd.f32 %v1246, %v1270
        %v1291 = vadd.f32 %v1247, %v1271
        %v1292 = vadd.f32 %v1248, %v1272
        %v1293 = vadd.f32 %v1249, %v1273
        %v1294 = vadd.f32 %v1250, %v1274
        %v1295 = vadd.f32 %v1251, %v1275
        %v1296 = vadd.f32 %v1252, %v1276
        %v1297 = vadd.f32 %v1253, %v1277
        %v1298 = vadd.f32 %v1254, %v1278
        %v1299 = vadd.f32 %v1255, %v1279
        %v1301 = vlaneseq
        %v1302 = vshrl.u32 %v1301, 7
        %v1303 = vsub.s32 0, %v1302
        %v1304 = vrot.slane %v851, %v1303
        %v1306 = vadd.f32 %v1280, %v1304
        %v1307 = vadd.f32 %v1281, %v1304
        %v1308 = vadd.f32 %v1282, %v1304
        %v1309 = vadd.f32 %v1283, %v1304
        %v1310 = vadd.f32 %v1284, %v1304
        %v1311 = vadd.f32 %v1285, %v1304
        %v1312 = vadd.f32 %v1286, %v1304
        %v1313 = vadd.f32 %v1287, %v1304
        %v1314 = vadd.f32 %v1288, %v1304
        %v1315 = vadd.f32 %v1289, %v1304
        %v1316 = vadd.f32 %v1290, %v1304
        %v1317 = vadd.f32 %v1291, %v1304
        %v1318 = vadd.f32 %v1292, %v1304
        %v1319 = vadd.f32 %v1293, %v1304
        %v1320 = vadd.f32 %v1294, %v1304
        %v1321 = vadd.f32 %v1295, %v1304
        %v1322 = vadd.f32 %v1296, %v1304
        %v1323 = vadd.f32 %v1297, %v1304
        %v1324 = vadd.f32 %v1298, %v1304
        %v1325 = vadd.f32 %v1299, %v1304
        %v1326 = vmax.f32 %v1306, 0.0
        %v1327 = vmax.f32 %v1307, 0.0
        %v1328 = vmax.f32 %v1308, 0.0
        %v1329 = vmax.f32 %v1309, 0.0
        %v1330 = vmax.f32 %v1310, 0.0
        %v1331 = vmax.f32 %v1311, 0.0
        %v1332 = vmax.f32 %v1312, 0.0
        %v1333 = vmax.f32 %v1313, 0.0
        %v1334 = vmax.f32 %v1314, 0.0
        %v1335 = vmax.f32 %v1315, 0.0
        %v1336 = vmax.f32 %v1316, 0.0
        %v1337 = vmax.f32 %v1317, 0.0
        %v1338 = vmax.f32 %v1318, 0.0
        %v1339 = vmax.f32 %v1319, 0.0
        %v1340 = vmax.f32 %v1320, 0.0
        %v1341 = vmax.f32 %v1321, 0.0
        %v1342 = vmax.f32 %v1322, 0.0
        %v1343 = vmax.f32 %v1323, 0.0
        %v1344 = vmax.f32 %v1324, 0.0
        %v1345 = vmax.f32 %v1325, 0.0
        %v1346 = vpack.c.bf16 %v1327, %v1326
        %v1347 = vpack.c.bf16 %v1329, %v1328
        %v1348 = vpack.c.bf16 %v1331, %v1330
        %v1349 = vpack.c.bf16 %v1333, %v1332
        %v1350 = vpack.c.bf16 %v1335, %v1334
        %v1351 = vpack.c.bf16 %v1337, %v1336
        %v1352 = vpack.c.bf16 %v1339, %v1338
        %v1353 = vpack.c.bf16 %v1341, %v1340
        %v1354 = vpack.c.bf16 %v1343, %v1342
        %v1355 = vpack.c.bf16 %v1345, %v1344
        %v1356 = vld [vmem:[#allocation13] sm:$0xf]
        %v1357 = vld [vmem:[#allocation13 + $0x4] sm:$0xf]
        %v1358 = vld [vmem:[#allocation13 + $0x8] sm:$0xf]
        %v1359 = vld [vmem:[#allocation13 + $0xc] sm:$0xf]
        %v1360 = vld [vmem:[#allocation13 + $0x10] sm:$0xf]
        %v1361 = vld [vmem:[#allocation13 + $0x14] sm:$0xf]
        %v1362 = vld [vmem:[#allocation13 + $0x18] sm:$0xf]
        %v1363 = vld [vmem:[#allocation13 + $0x1c] sm:$0xf]
        %v1364 = vld [vmem:[#allocation13 + $0x20] sm:$0xf]
        %v1365 = vld [vmem:[#allocation13 + $0x24] sm:$0xf]
        %v1366 = vld [vmem:[#allocation13 + $0x28] sm:$0xf]
        %v1367 = vld [vmem:[#allocation13 + $0x2c] sm:$0xf]
        %v1368 = vld [vmem:[#allocation13 + $0x30] sm:$0xf]
        %v1369 = vld [vmem:[#allocation13 + $0x34] sm:$0xf]
        %v1370 = vld [vmem:[#allocation13 + $0x38] sm:$0xf]
        %v1371 = vld [vmem:[#allocation13 + $0x3c] sm:$0xf]
        %v1372 = vld [vmem:[#allocation15] sm:$0x1]
        %v1374 = vlaneseq
        %v1375 = vshrl.u32 %v1374, 7
        %v1376 = vsub.s32 0, %v1375
        %v1377 = vrot.slane %v1372, %v1376
        %v1395 = vunpack.c.l.b16 %v1356
        %v1396 = vunpack.c.l.b16 %v1357
        %v1397 = vunpack.c.l.b16 %v1358
        %v1398 = vunpack.c.l.b16 %v1359
        %v1399 = vunpack.c.l.b16 %v1360
        %v1400 = vunpack.c.l.b16 %v1361
        %v1401 = vunpack.c.l.b16 %v1362
        %v1402 = vunpack.c.l.b16 %v1363
        %v1403 = vunpack.c.l.b16 %v1364
        %v1404 = vunpack.c.l.b16 %v1365
        %v1405 = vunpack.c.l.b16 %v1366
        %v1406 = vunpack.c.l.b16 %v1367
        %v1407 = vunpack.c.l.b16 %v1368
        %v1408 = vunpack.c.l.b16 %v1369
        %v1409 = vunpack.c.l.b16 %v1370
        %v1410 = vunpack.c.l.b16 %v1371
        %v1411 = vpack.c.b16 %v1396, %v1395
        %v1412 = vpack.c.b16 %v1398, %v1397
        %v1413 = vpack.c.b16 %v1400, %v1399
        %v1414 = vpack.c.b16 %v1402, %v1401
        %v1415 = vpack.c.b16 %v1404, %v1403
        %v1416 = vpack.c.b16 %v1406, %v1405
        %v1417 = vpack.c.b16 %v1408, %v1407
        %v1418 = vpack.c.b16 %v1410, %v1409
        %1427 = vmatprep.subr.bf16.mxu0 0
        %1428 = vmatpush1.bf16.msra.mxu0 %v1411
        %1429 = vmatprep.subr.bf16.mxu0 0
        %1430 = vmatpush1.bf16.msra.mxu0 %v1412
        %1431 = vmatprep.subr.bf16.mxu0 0
        %1432 = vmatpush1.bf16.msra.mxu0 %v1413
        %1433 = vmatprep.subr.bf16.mxu0 0
        %1434 = vmatpush1.bf16.msra.mxu0 %v1414
        %1435 = vmatprep.subr.bf16.mxu0 0
        %1436 = vmatpush1.bf16.msra.mxu0 %v1415
        %1437 = vmatprep.subr.bf16.mxu0 0
        %1438 = vmatpush1.bf16.msra.mxu0 %v1416
        %1439 = vmatprep.subr.bf16.mxu0 0
        %1440 = vmatpush1.bf16.msra.mxu0 %v1417
        %1441 = vmatprep.subr.bf16.mxu0 0
        %1442 = vmatpush1.bf16.msra.mxu0 %v1418
        %1443 = vmatprep.subr.bf16.mxu0 0
        %1444 = vmatpush1.bf16.msra.mxu0 0
        %1445 = vmatprep.subr.bf16.mxu0 0
        %1446 = vmatpush1.bf16.msra.mxu0 0
        %1447 = vmatprep.subr.bf16.mxu0 0
        %1448 = vmatpush1.bf16.msra.mxu0 0
        %1449 = vmatprep.subr.bf16.mxu0 0
        %1450 = vmatpush1.bf16.msra.mxu0 0
        %1451 = vmatprep.subr.bf16.mxu0 0
        %1452 = vmatpush1.bf16.msra.mxu0 0
        %1453 = vmatprep.subr.bf16.mxu0 0
        %1454 = vmatpush1.bf16.msra.mxu0 0
        %1455 = vmatprep.subr.bf16.mxu0 0
        %1456 = vmatpush1.bf16.msra.mxu0 0
        %1457 = vmatprep.subr.bf16.mxu0 0
        %1458 = vmatpush1.bf16.msra.mxu0 0
        %1459 = vmatprep.mubr.bf16.mxu0 0
        %1460 = vmatmul.mubr.bf16.gmra.mrb[0].mxu0 %v1346
        %v1461 = vpop.f32.mrb[0].mxu0
        %v1462 = vadd.f32 %v1377, %v1461
        %v1463 = vpop.f32.mrb[0].mxu0
        %v1464 = vpop.f32.mrb[0].mxu0
        %v1465 = vadd.f32 %v1377, %v1464
        %v1466 = vpop.f32.mrb[0].mxu0
        %1467 = vmatprep.mubr.bf16.mxu0 0
        %1468 = vmatmul.mubr.bf16.gmra.mrb[0].mxu0 %v1347
        %v1469 = vpop.f32.mrb[0].mxu0
        %v1470 = vadd.f32 %v1377, %v1469
        %v1471 = vpop.f32.mrb[0].mxu0
        %v1472 = vpop.f32.mrb[0].mxu0
        %v1473 = vadd.f32 %v1377, %v1472
        %v1474 = vpop.f32.mrb[0].mxu0
        %1475 = vmatprep.mubr.bf16.mxu0 0
        %1476 = vmatmul.mubr.bf16.gmra.mrb[0].mxu0 %v1348
        %v1477 = vpop.f32.mrb[0].mxu0
        %v1478 = vadd.f32 %v1377, %v1477
        %v1479 = vpop.f32.mrb[0].mxu0
        %v1480 = vpop.f32.mrb[0].mxu0
        %v1481 = vadd.f32 %v1377, %v1480
        %v1482 = vpop.f32.mrb[0].mxu0
        %1483 = vmatprep.mubr.bf16.mxu0 0
        %1484 = vmatmul.mubr.bf16.gmra.mrb[0].mxu0 %v1349
        %v1485 = vpop.f32.mrb[0].mxu0
        %v1486 = vadd.f32 %v1377, %v1485
        %v1487 = vpop.f32.mrb[0].mxu0
        %v1488 = vpop.f32.mrb[0].mxu0
        %v1489 = vadd.f32 %v1377, %v1488
        %v1490 = vpop.f32.mrb[0].mxu0
        %1491 = vmatprep.mubr.bf16.mxu0 0
        %1492 = vmatmul.mubr.bf16.gmra.mrb[0].mxu0 %v1350
        %v1493 = vpop.f32.mrb[0].mxu0
        %v1494 = vadd.f32 %v1377, %v1493
        %v1495 = vpop.f32.mrb[0].mxu0
        %v1496 = vpop.f32.mrb[0].mxu0
        %v1497 = vadd.f32 %v1377, %v1496
        %v1498 = vpop.f32.mrb[0].mxu0
        %1499 = vmatprep.mubr.bf16.mxu0 0
        %1500 = vmatmul.mubr.bf16.gmra.mrb[0].mxu0 %v1351
        %v1501 = vpop.f32.mrb[0].mxu0
        %v1502 = vadd.f32 %v1377, %v1501
        %v1503 = vpop.f32.mrb[0].mxu0
        %v1504 = vpop.f32.mrb[0].mxu0
        %v1505 = vadd.f32 %v1377, %v1504
        %v1506 = vpop.f32.mrb[0].mxu0
        %1507 = vmatprep.mubr.bf16.mxu0 0
        %1508 = vmatmul.mubr.bf16.gmra.mrb[0].mxu0 %v1352
        %v1509 = vpop.f32.mrb[0].mxu0
        %v1510 = vadd.f32 %v1377, %v1509
        %v1511 = vpop.f32.mrb[0].mxu0
        %v1512 = vpop.f32.mrb[0].mxu0
        %v1513 = vadd.f32 %v1377, %v1512
        %v1514 = vpop.f32.mrb[0].mxu0
        %1515 = vmatprep.mubr.bf16.mxu0 0
        %1516 = vmatmul.mubr.bf16.gmra.mrb[0].mxu0 %v1353
        %v1517 = vpop.f32.mrb[0].mxu0
        %v1518 = vadd.f32 %v1377, %v1517
        %v1519 = vpop.f32.mrb[0].mxu0
        %v1520 = vpop.f32.mrb[0].mxu0
        %v1521 = vadd.f32 %v1377, %v1520
        %v1522 = vpop.f32.mrb[0].mxu0
        %1523 = vmatprep.mubr.bf16.mxu0 0
        %1524 = vmatmul.mubr.bf16.gmra.mrb[0].mxu0 %v1354
        %v1525 = vpop.f32.mrb[0].mxu0
        %v1526 = vadd.f32 %v1377, %v1525
        %v1527 = vpop.f32.mrb[0].mxu0
        %v1528 = vpop.f32.mrb[0].mxu0
        %v1529 = vadd.f32 %v1377, %v1528
        %v1530 = vpop.f32.mrb[0].mxu0
        %1531 = vmatprep.mubr.bf16.mxu0 0
        %1532 = vmatmul.mubr.bf16.gmra.mrb[0].mxu0 %v1355
        %v1533 = vpop.f32.mrb[0].mxu0
        %v1534 = vadd.f32 %v1377, %v1533
        %v1535 = vpop.f32.mrb[0].mxu0
        %v1536 = vpop.f32.mrb[0].mxu0
        %v1537 = vadd.f32 %v1377, %v1536
        %v1538 = vpop.f32.mrb[0].mxu0
        %1539 = vdwg.mxu0
        %v1540 = vmax.f32 %v1462, 0.0
        %v1541 = vmax.f32 %v1465, 0.0
        %v1542 = vmax.f32 %v1470, 0.0
        %v1543 = vmax.f32 %v1473, 0.0
        %v1544 = vmax.f32 %v1478, 0.0
        %v1545 = vmax.f32 %v1481, 0.0
        %v1546 = vmax.f32 %v1486, 0.0
        %v1547 = vmax.f32 %v1489, 0.0
        %v1548 = vmax.f32 %v1494, 0.0
        %v1549 = vmax.f32 %v1497, 0.0
        %v1550 = vmax.f32 %v1502, 0.0
        %v1551 = vmax.f32 %v1505, 0.0
        %v1552 = vmax.f32 %v1510, 0.0
        %v1553 = vmax.f32 %v1513, 0.0
        %v1554 = vmax.f32 %v1518, 0.0
        %v1555 = vmax.f32 %v1521, 0.0
        %v1556 = vmax.f32 %v1526, 0.0
        %v1557 = vmax.f32 %v1529, 0.0
        %v1558 = vmax.f32 %v1534, 0.0
        %v1559 = vmax.f32 %v1537, 0.0
        %1560 = vst [vmem:[#allocation3 + $0x7] sm:$0x1] 0.0
        %1561 = vst [vmem:[#allocation3 + $0x27] sm:$0x1] 0.0
        %1562 = vst [vmem:[#allocation3 + $0x47] sm:$0x1] 0.0
        %1563 = vst [vmem:[#allocation3 + $0x67] sm:$0x1] 0.0
        %1564 = vst [vmem:[#allocation3 + $0x87] sm:$0x1] 0.0
        %1565 = vst [vmem:[#allocation3 + $0xa7] sm:$0x1] 0.0
        %1566 = vst [vmem:[#allocation3 + $0xc7] sm:$0x1] 0.0
        %1567 = vst [vmem:[#allocation3 + $0xe7] sm:$0x1] 0.0
        %1568 = vst [vmem:[#allocation3 + $0x107] sm:$0x1] 0.0
        %1569 = vst [vmem:[#allocation3 + $0x127] sm:$0x1] 0.0
        %1570 = vst [vmem:[#allocation3 + $0x18] sm:$0x1] 0.0
        %1571 = vst [vmem:[#allocation3 + $0x38] sm:$0x1] 0.0
        %1572 = vst [vmem:[#allocation3 + $0x58] sm:$0x1] 0.0
        %1573 = vst [vmem:[#allocation3 + $0x78] sm:$0x1] 0.0
        %1574 = vst [vmem:[#allocation3 + $0x98] sm:$0x1] 0.0
        %1575 = vst [vmem:[#allocation3 + $0xb8] sm:$0x1] 0.0
        %1576 = vst [vmem:[#allocation3 + $0xd8] sm:$0x1] 0.0
        %1577 = vst [vmem:[#allocation3 + $0xf8] sm:$0x1] 0.0
        %1578 = vst [vmem:[#allocation3 + $0x118] sm:$0x1] 0.0
        %1579 = vst [vmem:[#allocation3 + $0x138] sm:$0x1] 0.0
        %1580 = vst [vmem:[#allocation3 + $0x8] sm:$0xff] %v1540
        %1581 = vst [vmem:[#allocation3 + $0x10] sm:$0xff] %v1541
        %1582 = vst [vmem:[#allocation3 + $0x28] sm:$0xff] %v1542
        %1583 = vst [vmem:[#allocation3 + $0x30] sm:$0xff] %v1543
        %1584 = vst [vmem:[#allocation3 + $0x48] sm:$0xff] %v1544
        %1585 = vst [vmem:[#allocation3 + $0x50] sm:$0xff] %v1545
        %1586 = vst [vmem:[#allocation3 + $0x68] sm:$0xff] %v1546
        %1587 = vst [vmem:[#allocation3 + $0x70] sm:$0xff] %v1547
        %1588 = vst [vmem:[#allocation3 + $0x88] sm:$0xff] %v1548
        %1589 = vst [vmem:[#allocation3 + $0x90] sm:$0xff] %v1549
        %1590 = vst [vmem:[#allocation3 + $0xa8] sm:$0xff] %v1550
        %1591 = vst [vmem:[#allocation3 + $0xb0] sm:$0xff] %v1551
        %1592 = vst [vmem:[#allocation3 + $0xc8] sm:$0xff] %v1552
        %1593 = vst [vmem:[#allocation3 + $0xd0] sm:$0xff] %v1553
        %1594 = vst [vmem:[#allocation3 + $0xe8] sm:$0xff] %v1554
        %1595 = vst [vmem:[#allocation3 + $0xf0] sm:$0xff] %v1555
        %1596 = vst [vmem:[#allocation3 + $0x108] sm:$0xff] %v1556
        %1597 = vst [vmem:[#allocation3 + $0x110] sm:$0xff] %v1557
        %1598 = vst [vmem:[#allocation3 + $0x128] sm:$0xff] %v1558
        %1599 = vst [vmem:[#allocation3 + $0x130] sm:$0xff] %v1559
        %p1600 = scmp.eq.s32.totalorder %s43, 0
        // Predicated region
        $region125: #{tpu_custom_call.1} parent=71 // pred_check
          %p1601 = pneg %p1600
        $region126: #{tpu_custom_call.1} parent=71 // pred_check_branch
          %1603 = sbr.rel (%p1601) target = $region128
        $region127: #{tpu_custom_call.1} parent=71 // pred_region
          %1604 = vst [vmem:[#allocation3 + $0x8] sm:$0xff] 0.0
          %1605 = vst [vmem:[#allocation3 + $0x10] sm:$0xff] 0.0
        $region128: #{tpu_custom_call.1} parent=71 // pred_fallthru
          _
        %p1606 = scmp.eq.s32.totalorder %s43, 1
        // Predicated region
        $region129: #{tpu_custom_call.1} parent=71 // pred_check
          %p1607 = pneg %p1606
        $region130: #{tpu_custom_call.1} parent=71 // pred_check_branch
          %1609 = sbr.rel (%p1607) target = $region132
        $region131: #{tpu_custom_call.1} parent=71 // pred_region
          %s1610 = scalar_lea.vmem [#allocation3], 288
          %1611 = vst [vmem:[%s1610 + $0x8] sm:$0xff] 0.0
          %1612 = vst [vmem:[%s1610 + $0x10] sm:$0xff] 0.0
        $region132: #{tpu_custom_call.1} parent=71 // pred_fallthru
          _
        %v1613 = vld [vmem:[#allocation16] sm:$0x7]
        %v1614 = vld [vmem:[#allocation16 + $0x4] sm:$0x7]
        %v1615 = vld [vmem:[#allocation16 + $0x8] sm:$0x7]
        %v1616 = vld [vmem:[#allocation18] sm:$0x1]
        %v1617 = vld [vmem:[#allocation3 + $0x7] sm:$0xff]
        %v1618 = vld [vmem:[#allocation3 + $0xf] sm:$0xff]
        %v1619 = vld [vmem:[#allocation3 + $0x27] sm:$0xff]
        %v1620 = vld [vmem:[#allocation3 + $0x2f] sm:$0xff]
        %v1621 = vld [vmem:[#allocation3 + $0x47] sm:$0xff]
        %v1622 = vld [vmem:[#allocation3 + $0x4f] sm:$0xff]
        %v1623 = vld [vmem:[#allocation3 + $0x67] sm:$0xff]
        %v1624 = vld [vmem:[#allocation3 + $0x6f] sm:$0xff]
        %v1625 = vld [vmem:[#allocation3 + $0x87] sm:$0xff]
        %v1626 = vld [vmem:[#allocation3 + $0x8f] sm:$0xff]
        %v1627 = vld [vmem:[#allocation3 + $0xa7] sm:$0xff]
        %v1628 = vld [vmem:[#allocation3 + $0xaf] sm:$0xff]
        %v1629 = vld [vmem:[#allocation3 + $0xc7] sm:$0xff]
        %v1630 = vld [vmem:[#allocation3 + $0xcf] sm:$0xff]
        %v1631 = vld [vmem:[#allocation3 + $0xe7] sm:$0xff]
        %v1632 = vld [vmem:[#allocation3 + $0xef] sm:$0xff]
        %v1633 = vld [vmem:[#allocation3 + $0x107] sm:$0xff]
        %v1634 = vld [vmem:[#allocation3 + $0x10f] sm:$0xff]
        %v1635 = vld [vmem:[#allocation3 + $0x127] sm:$0xff]
        %v1636 = vld [vmem:[#allocation3 + $0x12f] sm:$0xff]
        %v1637 = vlaneseq
        %v1638 = vshrl.u32 %v1637, 7
        %v1639 = vsub.s32 0, %v1638
        %v1640 = vrot.slane %v1613, %v1639
        %v1641 = vmul.f32 %v1617, %v1640
        %v1642 = vmul.f32 %v1618, %v1640
        %v1643 = vmul.f32 %v1619, %v1640
        %v1644 = vmul.f32 %v1620, %v1640
        %v1645 = vmul.f32 %v1621, %v1640
        %v1646 = vmul.f32 %v1622, %v1640
        %v1647 = vmul.f32 %v1623, %v1640
        %v1648 = vmul.f32 %v1624, %v1640
        %v1649 = vmul.f32 %v1625, %v1640
        %v1650 = vmul.f32 %v1626, %v1640
        %v1651 = vmul.f32 %v1627, %v1640
        %v1652 = vmul.f32 %v1628, %v1640
        %v1653 = vmul.f32 %v1629, %v1640
        %v1654 = vmul.f32 %v1630, %v1640
        %v1655 = vmul.f32 %v1631, %v1640
        %v1656 = vmul.f32 %v1632, %v1640
        %v1657 = vlaneseq
        %v1658 = vshrl.u32 %v1657, 7
        %v1659 = vsub.s32 0, %v1658
        %v1660 = vrot.slane %v1614, %v1659
        %v1661 = vmul.f32 %v1619, %v1660
        %v1662 = vmul.f32 %v1620, %v1660
        %v1663 = vmul.f32 %v1621, %v1660
        %v1664 = vmul.f32 %v1622, %v1660
        %v1665 = vmul.f32 %v1623, %v1660
        %v1666 = vmul.f32 %v1624, %v1660
        %v1667 = vmul.f32 %v1625, %v1660
        %v1668 = vmul.f32 %v1626, %v1660
        %v1669 = vmul.f32 %v1627, %v1660
        %v1670 = vmul.f32 %v1628, %v1660
        %v1671 = vmul.f32 %v1629, %v1660
        %v1672 = vmul.f32 %v1630, %v1660
        %v1673 = vmul.f32 %v1631, %v1660
        %v1674 = vmul.f32 %v1632, %v1660
        %v1675 = vmul.f32 %v1633, %v1660
        %v1676 = vmul.f32 %v1634, %v1660
        %v1677 = vadd.f32 %v1641, %v1661
        %v1678 = vadd.f32 %v1642, %v1662
        %v1679 = vadd.f32 %v1643, %v1663
        %v1680 = vadd.f32 %v1644, %v1664
        %v1681 = vadd.f32 %v1645, %v1665
        %v1682 = vadd.f32 %v1646, %v1666
        %v1683 = vadd.f32 %v1647, %v1667
        %v1684 = vadd.f32 %v1648, %v1668
        %v1685 = vadd.f32 %v1649, %v1669
        %v1686 = vadd.f32 %v1650, %v1670
        %v1687 = vadd.f32 %v1651, %v1671
        %v1688 = vadd.f32 %v1652, %v1672
        %v1689 = vadd.f32 %v1653, %v1673
        %v1690 = vadd.f32 %v1654, %v1674
        %v1691 = vadd.f32 %v1655, %v1675
        %v1692 = vadd.f32 %v1656, %v1676
        %v1693 = vlaneseq
        %v1694 = vshrl.u32 %v1693, 7
        %v1695 = vsub.s32 0, %v1694
        %v1696 = vrot.slane %v1615, %v1695
        %v1697 = vmul.f32 %v1621, %v1696
        %v1698 = vmul.f32 %v1622, %v1696
        %v1699 = vmul.f32 %v1623, %v1696
        %v1700 = vmul.f32 %v1624, %v1696
        %v1701 = vmul.f32 %v1625, %v1696
        %v1702 = vmul.f32 %v1626, %v1696
        %v1703 = vmul.f32 %v1627, %v1696
        %v1704 = vmul.f32 %v1628, %v1696
        %v1705 = vmul.f32 %v1629, %v1696
        %v1706 = vmul.f32 %v1630, %v1696
        %v1707 = vmul.f32 %v1631, %v1696
        %v1708 = vmul.f32 %v1632, %v1696
        %v1709 = vmul.f32 %v1633, %v1696
        %v1710 = vmul.f32 %v1634, %v1696
        %v1711 = vmul.f32 %v1635, %v1696
        %v1712 = vmul.f32 %v1636, %v1696
        %v1713 = vadd.f32 %v1677, %v1697
        %v1714 = vadd.f32 %v1678, %v1698
        %v1715 = vadd.f32 %v1679, %v1699
        %v1716 = vadd.f32 %v1680, %v1700
        %v1717 = vadd.f32 %v1681, %v1701
        %v1718 = vadd.f32 %v1682, %v1702
        %v1719 = vadd.f32 %v1683, %v1703
        %v1720 = vadd.f32 %v1684, %v1704
        %v1721 = vadd.f32 %v1685, %v1705
        %v1722 = vadd.f32 %v1686, %v1706
        %v1723 = vadd.f32 %v1687, %v1707
        %v1724 = vadd.f32 %v1688, %v1708
        %v1725 = vadd.f32 %v1689, %v1709
        %v1726 = vadd.f32 %v1690, %v1710
        %v1727 = vadd.f32 %v1691, %v1711
        %v1728 = vadd.f32 %v1692, %v1712
        %v1729 = vld [vmem:[#allocation3 + $0x8] sm:$0xff]
        %v1730 = vld [vmem:[#allocation3 + $0x10] sm:$0xff]
        %v1731 = vld [vmem:[#allocation3 + $0x28] sm:$0xff]
        %v1732 = vld [vmem:[#allocation3 + $0x30] sm:$0xff]
        %v1733 = vld [vmem:[#allocation3 + $0x48] sm:$0xff]
        %v1734 = vld [vmem:[#allocation3 + $0x50] sm:$0xff]
        %v1735 = vld [vmem:[#allocation3 + $0x68] sm:$0xff]
        %v1736 = vld [vmem:[#allocation3 + $0x70] sm:$0xff]
        %v1737 = vld [vmem:[#allocation3 + $0x88] sm:$0xff]
        %v1738 = vld [vmem:[#allocation3 + $0x90] sm:$0xff]
        %v1739 = vld [vmem:[#allocation3 + $0xa8] sm:$0xff]
        %v1740 = vld [vmem:[#allocation3 + $0xb0] sm:$0xff]
        %v1741 = vld [vmem:[#allocation3 + $0xc8] sm:$0xff]
        %v1742 = vld [vmem:[#allocation3 + $0xd0] sm:$0xff]
        %v1743 = vld [vmem:[#allocation3 + $0xe8] sm:$0xff]
        %v1744 = vld [vmem:[#allocation3 + $0xf0] sm:$0xff]
        %v1745 = vld [vmem:[#allocation3 + $0x108] sm:$0xff]
        %v1746 = vld [vmem:[#allocation3 + $0x110] sm:$0xff]
        %v1747 = vld [vmem:[#allocation3 + $0x128] sm:$0xff]
        %v1748 = vld [vmem:[#allocation3 + $0x130] sm:$0xff]
        %v1749 = vlaneseq
        %v1750 = vshrl.u32 %v1749, 7
        %v1751 = vsub.s32 1, %v1750
        %v1752 = vrot.slane %v1613, %v1751
        %v1753 = vmul.f32 %v1729, %v1752
        %v1754 = vmul.f32 %v1730, %v1752
        %v1755 = vmul.f32 %v1731, %v1752
        %v1756 = vmul.f32 %v1732, %v1752
        %v1757 = vmul.f32 %v1733, %v1752
        %v1758 = vmul.f32 %v1734, %v1752
        %v1759 = vmul.f32 %v1735, %v1752
        %v1760 = vmul.f32 %v1736, %v1752
        %v1761 = vmul.f32 %v1737, %v1752
        %v1762 = vmul.f32 %v1738, %v1752
        %v1763 = vmul.f32 %v1739, %v1752
        %v1764 = vmul.f32 %v1740, %v1752
        %v1765 = vmul.f32 %v1741, %v1752
        %v1766 = vmul.f32 %v1742, %v1752
        %v1767 = vmul.f32 %v1743, %v1752
        %v1768 = vmul.f32 %v1744, %v1752
        %v1769 = vadd.f32 %v1713, %v1753
        %v1770 = vadd.f32 %v1714, %v1754
        %v1771 = vadd.f32 %v1715, %v1755
        %v1772 = vadd.f32 %v1716, %v1756
        %v1773 = vadd.f32 %v1717, %v1757
        %v1774 = vadd.f32 %v1718, %v1758
        %v1775 = vadd.f32 %v1719, %v1759
        %v1776 = vadd.f32 %v1720, %v1760
        %v1777 = vadd.f32 %v1721, %v1761
        %v1778 = vadd.f32 %v1722, %v1762
        %v1779 = vadd.f32 %v1723, %v1763
        %v1780 = vadd.f32 %v1724, %v1764
        %v1781 = vadd.f32 %v1725, %v1765
        %v1782 = vadd.f32 %v1726, %v1766
        %v1783 = vadd.f32 %v1727, %v1767
        %v1784 = vadd.f32 %v1728, %v1768
        %v1785 = vlaneseq
        %v1786 = vshrl.u32 %v1785, 7
        %v1787 = vsub.s32 1, %v1786
        %v1788 = vrot.slane %v1614, %v1787
        %v1789 = vmul.f32 %v1731, %v1788
        %v1790 = vmul.f32 %v1732, %v1788
        %v1791 = vmul.f32 %v1733, %v1788
        %v1792 = vmul.f32 %v1734, %v1788
        %v1793 = vmul.f32 %v1735, %v1788
        %v1794 = vmul.f32 %v1736, %v1788
        %v1795 = vmul.f32 %v1737, %v1788
        %v1796 = vmul.f32 %v1738, %v1788
        %v1797 = vmul.f32 %v1739, %v1788
        %v1798 = vmul.f32 %v1740, %v1788
        %v1799 = vmul.f32 %v1741, %v1788
        %v1800 = vmul.f32 %v1742, %v1788
        %v1801 = vmul.f32 %v1743, %v1788
        %v1802 = vmul.f32 %v1744, %v1788
        %v1803 = vmul.f32 %v1745, %v1788
        %v1804 = vmul.f32 %v1746, %v1788
        %v1805 = vadd.f32 %v1769, %v1789
        %v1806 = vadd.f32 %v1770, %v1790
        %v1807 = vadd.f32 %v1771, %v1791
        %v1808 = vadd.f32 %v1772, %v1792
        %v1809 = vadd.f32 %v1773, %v1793
        %v1810 = vadd.f32 %v1774, %v1794
        %v1811 = vadd.f32 %v1775, %v1795
        %v1812 = vadd.f32 %v1776, %v1796
        %v1813 = vadd.f32 %v1777, %v1797
        %v1814 = vadd.f32 %v1778, %v1798
        %v1815 = vadd.f32 %v1779, %v1799
        %v1816 = vadd.f32 %v1780, %v1800
        %v1817 = vadd.f32 %v1781, %v1801
        %v1818 = vadd.f32 %v1782, %v1802
        %v1819 = vadd.f32 %v1783, %v1803
        %v1820 = vadd.f32 %v1784, %v1804
        %v1821 = vlaneseq
        %v1822 = vshrl.u32 %v1821, 7
        %v1823 = vsub.s32 1, %v1822
        %v1824 = vrot.slane %v1615, %v1823
        %v1825 = vmul.f32 %v1733, %v1824
        %v1826 = vmul.f32 %v1734, %v1824
        %v1827 = vmul.f32 %v1735, %v1824
        %v1828 = vmul.f32 %v1736, %v1824
        %v1829 = vmul.f32 %v1737, %v1824
        %v1830 = vmul.f32 %v1738, %v1824
        %v1831 = vmul.f32 %v1739, %v1824
        %v1832 = vmul.f32 %v1740, %v1824
        %v1833 = vmul.f32 %v1741, %v1824
        %v1834 = vmul.f32 %v1742, %v1824
        %v1835 = vmul.f32 %v1743, %v1824
        %v1836 = vmul.f32 %v1744, %v1824
        %v1837 = vmul.f32 %v1745, %v1824
        %v1838 = vmul.f32 %v1746, %v1824
        %v1839 = vmul.f32 %v1747, %v1824
        %v1840 = vmul.f32 %v1748, %v1824
        %v1841 = vadd.f32 %v1805, %v1825
        %v1842 = vadd.f32 %v1806, %v1826
        %v1843 = vadd.f32 %v1807, %v1827
        %v1844 = vadd.f32 %v1808, %v1828
        %v1845 = vadd.f32 %v1809, %v1829
        %v1846 = vadd.f32 %v1810, %v1830
        %v1847 = vadd.f32 %v1811, %v1831
        %v1848 = vadd.f32 %v1812, %v1832
        %v1849 = vadd.f32 %v1813, %v1833
        %v1850 = vadd.f32 %v1814, %v1834
        %v1851 = vadd.f32 %v1815, %v1835
        %v1852 = vadd.f32 %v1816, %v1836
        %v1853 = vadd.f32 %v1817, %v1837
        %v1854 = vadd.f32 %v1818, %v1838
        %v1855 = vadd.f32 %v1819, %v1839
        %v1856 = vadd.f32 %v1820, %v1840
        %v1857 = vld [vmem:[#allocation3 + $0x9] sm:$0xff]
        %v1858 = vld [vmem:[#allocation3 + $0x11] sm:$0xff]
        %v1859 = vld [vmem:[#allocation3 + $0x29] sm:$0xff]
        %v1860 = vld [vmem:[#allocation3 + $0x31] sm:$0xff]
        %v1861 = vld [vmem:[#allocation3 + $0x49] sm:$0xff]
        %v1862 = vld [vmem:[#allocation3 + $0x51] sm:$0xff]
        %v1863 = vld [vmem:[#allocation3 + $0x69] sm:$0xff]
        %v1864 = vld [vmem:[#allocation3 + $0x71] sm:$0xff]
        %v1865 = vld [vmem:[#allocation3 + $0x89] sm:$0xff]
        %v1866 = vld [vmem:[#allocation3 + $0x91] sm:$0xff]
        %v1867 = vld [vmem:[#allocation3 + $0xa9] sm:$0xff]
        %v1868 = vld [vmem:[#allocation3 + $0xb1] sm:$0xff]
        %v1869 = vld [vmem:[#allocation3 + $0xc9] sm:$0xff]
        %v1870 = vld [vmem:[#allocation3 + $0xd1] sm:$0xff]
        %v1871 = vld [vmem:[#allocation3 + $0xe9] sm:$0xff]
        %v1872 = vld [vmem:[#allocation3 + $0xf1] sm:$0xff]
        %v1873 = vld [vmem:[#allocation3 + $0x109] sm:$0xff]
        %v1874 = vld [vmem:[#allocation3 + $0x111] sm:$0xff]
        %v1875 = vld [vmem:[#allocation3 + $0x129] sm:$0xff]
        %v1876 = vld [vmem:[#allocation3 + $0x131] sm:$0xff]
        %v1877 = vlaneseq
        %v1878 = vshrl.u32 %v1877, 7
        %v1879 = vsub.s32 2, %v1878
        %v1880 = vrot.slane %v1613, %v1879
        %v1881 = vmul.f32 %v1857, %v1880
        %v1882 = vmul.f32 %v1858, %v1880
        %v1883 = vmul.f32 %v1859, %v1880
        %v1884 = vmul.f32 %v1860, %v1880
        %v1885 = vmul.f32 %v1861, %v1880
        %v1886 = vmul.f32 %v1862, %v1880
        %v1887 = vmul.f32 %v1863, %v1880
        %v1888 = vmul.f32 %v1864, %v1880
        %v1889 = vmul.f32 %v1865, %v1880
        %v1890 = vmul.f32 %v1866, %v1880
        %v1891 = vmul.f32 %v1867, %v1880
        %v1892 = vmul.f32 %v1868, %v1880
        %v1893 = vmul.f32 %v1869, %v1880
        %v1894 = vmul.f32 %v1870, %v1880
        %v1895 = vmul.f32 %v1871, %v1880
        %v1896 = vmul.f32 %v1872, %v1880
        %v1897 = vadd.f32 %v1841, %v1881
        %v1898 = vadd.f32 %v1842, %v1882
        %v1899 = vadd.f32 %v1843, %v1883
        %v1900 = vadd.f32 %v1844, %v1884
        %v1901 = vadd.f32 %v1845, %v1885
        %v1902 = vadd.f32 %v1846, %v1886
        %v1903 = vadd.f32 %v1847, %v1887
        %v1904 = vadd.f32 %v1848, %v1888
        %v1905 = vadd.f32 %v1849, %v1889
        %v1906 = vadd.f32 %v1850, %v1890
        %v1907 = vadd.f32 %v1851, %v1891
        %v1908 = vadd.f32 %v1852, %v1892
        %v1909 = vadd.f32 %v1853, %v1893
        %v1910 = vadd.f32 %v1854, %v1894
        %v1911 = vadd.f32 %v1855, %v1895
        %v1912 = vadd.f32 %v1856, %v1896
        %v1913 = vlaneseq
        %v1914 = vshrl.u32 %v1913, 7
        %v1915 = vsub.s32 2, %v1914
        %v1916 = vrot.slane %v1614, %v1915
        %v1917 = vmul.f32 %v1859, %v1916
        %v1918 = vmul.f32 %v1860, %v1916
        %v1919 = vmul.f32 %v1861, %v1916
        %v1920 = vmul.f32 %v1862, %v1916
        %v1921 = vmul.f32 %v1863, %v1916
        %v1922 = vmul.f32 %v1864, %v1916
        %v1923 = vmul.f32 %v1865, %v1916
        %v1924 = vmul.f32 %v1866, %v1916
        %v1925 = vmul.f32 %v1867, %v1916
        %v1926 = vmul.f32 %v1868, %v1916
        %v1927 = vmul.f32 %v1869, %v1916
        %v1928 = vmul.f32 %v1870, %v1916
        %v1929 = vmul.f32 %v1871, %v1916
        %v1930 = vmul.f32 %v1872, %v1916
        %v1931 = vmul.f32 %v1873, %v1916
        %v1932 = vmul.f32 %v1874, %v1916
        %v1933 = vadd.f32 %v1897, %v1917
        %v1934 = vadd.f32 %v1898, %v1918
        %v1935 = vadd.f32 %v1899, %v1919
        %v1936 = vadd.f32 %v1900, %v1920
        %v1937 = vadd.f32 %v1901, %v1921
        %v1938 = vadd.f32 %v1902, %v1922
        %v1939 = vadd.f32 %v1903, %v1923
        %v1940 = vadd.f32 %v1904, %v1924
        %v1941 = vadd.f32 %v1905, %v1925
        %v1942 = vadd.f32 %v1906, %v1926
        %v1943 = vadd.f32 %v1907, %v1927
        %v1944 = vadd.f32 %v1908, %v1928
        %v1945 = vadd.f32 %v1909, %v1929
        %v1946 = vadd.f32 %v1910, %v1930
        %v1947 = vadd.f32 %v1911, %v1931
        %v1948 = vadd.f32 %v1912, %v1932
        %v1949 = vlaneseq
        %v1950 = vshrl.u32 %v1949, 7
        %v1951 = vsub.s32 2, %v1950
        %v1952 = vrot.slane %v1615, %v1951
        %v1953 = vmul.f32 %v1861, %v1952
        %v1954 = vmul.f32 %v1862, %v1952
        %v1955 = vmul.f32 %v1863, %v1952
        %v1956 = vmul.f32 %v1864, %v1952
        %v1957 = vmul.f32 %v1865, %v1952
        %v1958 = vmul.f32 %v1866, %v1952
        %v1959 = vmul.f32 %v1867, %v1952
        %v1960 = vmul.f32 %v1868, %v1952
        %v1961 = vmul.f32 %v1869, %v1952
        %v1962 = vmul.f32 %v1870, %v1952
        %v1963 = vmul.f32 %v1871, %v1952
        %v1964 = vmul.f32 %v1872, %v1952
        %v1965 = vmul.f32 %v1873, %v1952
        %v1966 = vmul.f32 %v1874, %v1952
        %v1967 = vmul.f32 %v1875, %v1952
        %v1968 = vmul.f32 %v1876, %v1952
        %v1969 = vadd.f32 %v1933, %v1953
        %v1970 = vadd.f32 %v1934, %v1954
        %v1971 = vadd.f32 %v1935, %v1955
        %v1972 = vadd.f32 %v1936, %v1956
        %v1973 = vadd.f32 %v1937, %v1957
        %v1974 = vadd.f32 %v1938, %v1958
        %v1975 = vadd.f32 %v1939, %v1959
        %v1976 = vadd.f32 %v1940, %v1960
        %v1977 = vadd.f32 %v1941, %v1961
        %v1978 = vadd.f32 %v1942, %v1962
        %v1979 = vadd.f32 %v1943, %v1963
        %v1980 = vadd.f32 %v1944, %v1964
        %v1981 = vadd.f32 %v1945, %v1965
        %v1982 = vadd.f32 %v1946, %v1966
        %v1983 = vadd.f32 %v1947, %v1967
        %v1984 = vadd.f32 %v1948, %v1968
        %v1986 = vlaneseq
        %v1987 = vshrl.u32 %v1986, 7
        %v1988 = vsub.s32 0, %v1987
        %v1989 = vrot.slane %v1616, %v1988
        %v1991 = vadd.f32 %v1969, %v1989
        %v1992 = vadd.f32 %v1970, %v1989
        %v1993 = vadd.f32 %v1971, %v1989
        %v1994 = vadd.f32 %v1972, %v1989
        %v1995 = vadd.f32 %v1973, %v1989
        %v1996 = vadd.f32 %v1974, %v1989
        %v1997 = vadd.f32 %v1975, %v1989
        %v1998 = vadd.f32 %v1976, %v1989
        %v1999 = vadd.f32 %v1977, %v1989
        %v2000 = vadd.f32 %v1978, %v1989
        %v2001 = vadd.f32 %v1979, %v1989
        %v2002 = vadd.f32 %v1980, %v1989
        %v2003 = vadd.f32 %v1981, %v1989
        %v2004 = vadd.f32 %v1982, %v1989
        %v2005 = vadd.f32 %v1983, %v1989
        %v2006 = vadd.f32 %v1984, %v1989
        %v2007 = vmax.f32 %v1991, 0.0
        %v2008 = vmax.f32 %v1992, 0.0
        %v2009 = vmax.f32 %v1993, 0.0
        %v2010 = vmax.f32 %v1994, 0.0
        %v2011 = vmax.f32 %v1995, 0.0
        %v2012 = vmax.f32 %v1996, 0.0
        %v2013 = vmax.f32 %v1997, 0.0
        %v2014 = vmax.f32 %v1998, 0.0
        %v2015 = vmax.f32 %v1999, 0.0
        %v2016 = vmax.f32 %v2000, 0.0
        %v2017 = vmax.f32 %v2001, 0.0
        %v2018 = vmax.f32 %v2002, 0.0
        %v2019 = vmax.f32 %v2003, 0.0
        %v2020 = vmax.f32 %v2004, 0.0
        %v2021 = vmax.f32 %v2005, 0.0
        %v2022 = vmax.f32 %v2006, 0.0
        %v2023 = vpack.c.bf16 %v2008, %v2007
        %v2024 = vpack.c.bf16 %v2010, %v2009
        %v2025 = vpack.c.bf16 %v2012, %v2011
        %v2026 = vpack.c.bf16 %v2014, %v2013
        %v2027 = vpack.c.bf16 %v2016, %v2015
        %v2028 = vpack.c.bf16 %v2018, %v2017
        %v2029 = vpack.c.bf16 %v2020, %v2019
        %v2030 = vpack.c.bf16 %v2022, %v2021
        %v2031 = vld [vmem:[#allocation19] sm:$0xf]
        %v2032 = vld [vmem:[#allocation19 + $0x4] sm:$0xf]
        %v2033 = vld [vmem:[#allocation19 + $0x8] sm:$0xf]
        %v2034 = vld [vmem:[#allocation19 + $0xc] sm:$0xf]
        %v2035 = vld [vmem:[#allocation19 + $0x10] sm:$0xf]
        %v2036 = vld [vmem:[#allocation19 + $0x14] sm:$0xf]
        %v2037 = vld [vmem:[#allocation19 + $0x18] sm:$0xf]
        %v2038 = vld [vmem:[#allocation19 + $0x1c] sm:$0xf]
        %v2039 = vld [vmem:[#allocation19 + $0x20] sm:$0xf]
        %v2040 = vld [vmem:[#allocation19 + $0x24] sm:$0xf]
        %v2041 = vld [vmem:[#allocation19 + $0x28] sm:$0xf]
        %v2042 = vld [vmem:[#allocation19 + $0x2c] sm:$0xf]
        %v2043 = vld [vmem:[#allocation19 + $0x30] sm:$0xf]
        %v2044 = vld [vmem:[#allocation19 + $0x34] sm:$0xf]
        %v2045 = vld [vmem:[#allocation19 + $0x38] sm:$0xf]
        %v2046 = vld [vmem:[#allocation19 + $0x3c] sm:$0xf]
        %v2047 = vld [vmem:[#allocation21] sm:$0x1]
        %v2049 = vlaneseq
        %v2050 = vshrl.u32 %v2049, 7
        %v2051 = vsub.s32 0, %v2050
        %v2052 = vrot.slane %v2047, %v2051
        %v2070 = vunpack.c.l.b16 %v2031
        %v2071 = vunpack.c.l.b16 %v2032
        %v2072 = vunpack.c.l.b16 %v2033
        %v2073 = vunpack.c.l.b16 %v2034
        %v2074 = vunpack.c.l.b16 %v2035
        %v2075 = vunpack.c.l.b16 %v2036
        %v2076 = vunpack.c.l.b16 %v2037
        %v2077 = vunpack.c.l.b16 %v2038
        %v2078 = vunpack.c.l.b16 %v2039
        %v2079 = vunpack.c.l.b16 %v2040
        %v2080 = vunpack.c.l.b16 %v2041
        %v2081 = vunpack.c.l.b16 %v2042
        %v2082 = vunpack.c.l.b16 %v2043
        %v2083 = vunpack.c.l.b16 %v2044
        %v2084 = vunpack.c.l.b16 %v2045
        %v2085 = vunpack.c.l.b16 %v2046
        %v2086 = vpack.c.b16 %v2071, %v2070
        %v2087 = vpack.c.b16 %v2073, %v2072
        %v2088 = vpack.c.b16 %v2075, %v2074
        %v2089 = vpack.c.b16 %v2077, %v2076
        %v2090 = vpack.c.b16 %v2079, %v2078
        %v2091 = vpack.c.b16 %v2081, %v2080
        %v2092 = vpack.c.b16 %v2083, %v2082
        %v2093 = vpack.c.b16 %v2085, %v2084
        %2102 = vmatprep.subr.bf16.mxu0 0
        %2103 = vmatpush1.bf16.msra.mxu0 %v2086
        %2104 = vmatprep.subr.bf16.mxu0 0
        %2105 = vmatpush1.bf16.msra.mxu0 %v2087
        %2106 = vmatprep.subr.bf16.mxu0 0
        %2107 = vmatpush1.bf16.msra.mxu0 %v2088
        %2108 = vmatprep.subr.bf16.mxu0 0
        %2109 = vmatpush1.bf16.msra.mxu0 %v2089
        %2110 = vmatprep.subr.bf16.mxu0 0
        %2111 = vmatpush1.bf16.msra.mxu0 %v2090
        %2112 = vmatprep.subr.bf16.mxu0 0
        %2113 = vmatpush1.bf16.msra.mxu0 %v2091
        %2114 = vmatprep.subr.bf16.mxu0 0
        %2115 = vmatpush1.bf16.msra.mxu0 %v2092
        %2116 = vmatprep.subr.bf16.mxu0 0
        %2117 = vmatpush1.bf16.msra.mxu0 %v2093
        %2118 = vmatprep.subr.bf16.mxu0 0
        %2119 = vmatpush1.bf16.msra.mxu0 0
        %2120 = vmatprep.subr.bf16.mxu0 0
        %2121 = vmatpush1.bf16.msra.mxu0 0
        %2122 = vmatprep.subr.bf16.mxu0 0
        %2123 = vmatpush1.bf16.msra.mxu0 0
        %2124 = vmatprep.subr.bf16.mxu0 0
        %2125 = vmatpush1.bf16.msra.mxu0 0
        %2126 = vmatprep.subr.bf16.mxu0 0
        %2127 = vmatpush1.bf16.msra.mxu0 0
        %2128 = vmatprep.subr.bf16.mxu0 0
        %2129 = vmatpush1.bf16.msra.mxu0 0
        %2130 = vmatprep.subr.bf16.mxu0 0
        %2131 = vmatpush1.bf16.msra.mxu0 0
        %2132 = vmatprep.subr.bf16.mxu0 0
        %2133 = vmatpush1.bf16.msra.mxu0 0
        %2134 = vmatprep.mubr.bf16.mxu0 0
        %2135 = vmatmul.mubr.bf16.gmra.mrb[0].mxu0 %v2023
        %v2136 = vpop.f32.mrb[0].mxu0
        %v2137 = vadd.f32 %v2052, %v2136
        %v2138 = vpop.f32.mrb[0].mxu0
        %v2139 = vpop.f32.mrb[0].mxu0
        %v2140 = vadd.f32 %v2052, %v2139
        %v2141 = vpop.f32.mrb[0].mxu0
        %2142 = vmatprep.mubr.bf16.mxu0 0
        %2143 = vmatmul.mubr.bf16.gmra.mrb[0].mxu0 %v2024
        %v2144 = vpop.f32.mrb[0].mxu0
        %v2145 = vadd.f32 %v2052, %v2144
        %v2146 = vpop.f32.mrb[0].mxu0
        %v2147 = vpop.f32.mrb[0].mxu0
        %v2148 = vadd.f32 %v2052, %v2147
        %v2149 = vpop.f32.mrb[0].mxu0
        %2150 = vmatprep.mubr.bf16.mxu0 0
        %2151 = vmatmul.mubr.bf16.gmra.mrb[0].mxu0 %v2025
        %v2152 = vpop.f32.mrb[0].mxu0
        %v2153 = vadd.f32 %v2052, %v2152
        %v2154 = vpop.f32.mrb[0].mxu0
        %v2155 = vpop.f32.mrb[0].mxu0
        %v2156 = vadd.f32 %v2052, %v2155
        %v2157 = vpop.f32.mrb[0].mxu0
        %2158 = vmatprep.mubr.bf16.mxu0 0
        %2159 = vmatmul.mubr.bf16.gmra.mrb[0].mxu0 %v2026
        %v2160 = vpop.f32.mrb[0].mxu0
        %v2161 = vadd.f32 %v2052, %v2160
        %v2162 = vpop.f32.mrb[0].mxu0
        %v2163 = vpop.f32.mrb[0].mxu0
        %v2164 = vadd.f32 %v2052, %v2163
        %v2165 = vpop.f32.mrb[0].mxu0
        %2166 = vmatprep.mubr.bf16.mxu0 0
        %2167 = vmatmul.mubr.bf16.gmra.mrb[0].mxu0 %v2027
        %v2168 = vpop.f32.mrb[0].mxu0
        %v2169 = vadd.f32 %v2052, %v2168
        %v2170 = vpop.f32.mrb[0].mxu0
        %v2171 = vpop.f32.mrb[0].mxu0
        %v2172 = vadd.f32 %v2052, %v2171
        %v2173 = vpop.f32.mrb[0].mxu0
        %2174 = vmatprep.mubr.bf16.mxu0 0
        %2175 = vmatmul.mubr.bf16.gmra.mrb[0].mxu0 %v2028
        %v2176 = vpop.f32.mrb[0].mxu0
        %v2177 = vadd.f32 %v2052, %v2176
        %v2178 = vpop.f32.mrb[0].mxu0
        %v2179 = vpop.f32.mrb[0].mxu0
        %v2180 = vadd.f32 %v2052, %v2179
        %v2181 = vpop.f32.mrb[0].mxu0
        %2182 = vmatprep.mubr.bf16.mxu0 0
        %2183 = vmatmul.mubr.bf16.gmra.mrb[0].mxu0 %v2029
        %v2184 = vpop.f32.mrb[0].mxu0
        %v2185 = vadd.f32 %v2052, %v2184
        %v2186 = vpop.f32.mrb[0].mxu0
        %v2187 = vpop.f32.mrb[0].mxu0
        %v2188 = vadd.f32 %v2052, %v2187
        %v2189 = vpop.f32.mrb[0].mxu0
        %2190 = vmatprep.mubr.bf16.mxu0 0
        %2191 = vmatmul.mubr.bf16.gmra.mrb[0].mxu0 %v2030
        %v2192 = vpop.f32.mrb[0].mxu0
        %v2193 = vadd.f32 %v2052, %v2192
        %v2194 = vpop.f32.mrb[0].mxu0
        %v2195 = vpop.f32.mrb[0].mxu0
        %v2196 = vadd.f32 %v2052, %v2195
        %v2197 = vpop.f32.mrb[0].mxu0
        %2198 = vdwg.mxu0
        %v2199 = vmax.f32 %v2137, 0.0
        %v2200 = vmax.f32 %v2140, 0.0
        %v2201 = vmax.f32 %v2145, 0.0
        %v2202 = vmax.f32 %v2148, 0.0
        %v2203 = vmax.f32 %v2153, 0.0
        %v2204 = vmax.f32 %v2156, 0.0
        %v2205 = vmax.f32 %v2161, 0.0
        %v2206 = vmax.f32 %v2164, 0.0
        %v2207 = vmax.f32 %v2169, 0.0
        %v2208 = vmax.f32 %v2172, 0.0
        %v2209 = vmax.f32 %v2177, 0.0
        %v2210 = vmax.f32 %v2180, 0.0
        %v2211 = vmax.f32 %v2185, 0.0
        %v2212 = vmax.f32 %v2188, 0.0
        %v2213 = vmax.f32 %v2193, 0.0
        %v2214 = vmax.f32 %v2196, 0.0
        %v2215 = vld [vmem:[#allocation22] sm:$0xf]
        %v2216 = vpack.c.bf16 %v2200, %v2199
        %v2217 = vpack.c.bf16 %v2202, %v2201
        %v2218 = vpack.c.bf16 %v2204, %v2203
        %v2219 = vpack.c.bf16 %v2206, %v2205
        %v2220 = vpack.c.bf16 %v2208, %v2207
        %v2221 = vpack.c.bf16 %v2210, %v2209
        %v2222 = vpack.c.bf16 %v2212, %v2211
        %v2223 = vpack.c.bf16 %v2214, %v2213
        %v2224 = vld [vmem:[#allocation24] sm:$0xff]
        %2226 = vset.pattern.permute.xlu0 0
        %2227 = vperm.xlu0 %2226, %v2224
        %v2228 = vpop.permute.xlu0 %2227
        %2230 = vmatprep.subr.bf16.mxu0 0
        %2231 = vmatpush1.bf16.xpose.msra.mxu0 %v2216
        %2232 = vmatprep.subr.bf16.mxu0 0
        %2233 = vmatpush1.bf16.xpose.msra.mxu0 %v2217
        %2234 = vmatprep.subr.bf16.mxu0 0
        %2235 = vmatpush1.bf16.xpose.msra.mxu0 %v2218
        %2236 = vmatprep.subr.bf16.mxu0 0
        %2237 = vmatpush1.bf16.xpose.msra.mxu0 %v2219
        %2238 = vmatprep.subr.bf16.mxu0 0
        %2239 = vmatpush1.bf16.xpose.msra.mxu0 %v2220
        %2240 = vmatprep.subr.bf16.mxu0 0
        %2241 = vmatpush1.bf16.xpose.msra.mxu0 %v2221
        %2242 = vmatprep.subr.bf16.mxu0 0
        %2243 = vmatpush1.bf16.xpose.msra.mxu0 %v2222
        %2244 = vmatprep.subr.bf16.mxu0 0
        %2245 = vmatpush1.bf16.xpose.msra.mxu0 %v2223
        %2246 = vmatprep.subr.bf16.mxu0 0
        %2247 = vmatpush1.bf16.xpose.msra.mxu0 0
        %2248 = vmatprep.subr.bf16.mxu0 0
        %2249 = vmatpush1.bf16.xpose.msra.mxu0 0
        %2250 = vmatprep.subr.bf16.mxu0 0
        %2251 = vmatpush1.bf16.xpose.msra.mxu0 0
        %2252 = vmatprep.subr.bf16.mxu0 0
        %2253 = vmatpush1.bf16.xpose.msra.mxu0 0
        %2254 = vmatprep.subr.bf16.mxu0 0
        %2255 = vmatpush1.bf16.xpose.msra.mxu0 0
        %2256 = vmatprep.subr.bf16.mxu0 0
        %2257 = vmatpush1.bf16.xpose.msra.mxu0 0
        %2258 = vmatprep.subr.bf16.mxu0 0
        %2259 = vmatpush1.bf16.xpose.msra.mxu0 0
        %2260 = vmatprep.subr.bf16.mxu0 0
        %2261 = vmatpush1.bf16.xpose.msra.mxu0 0
        %2262 = vmatprep.mubr.bf16.mxu0 0
        %2263 = vmatmul.mubr.bf16.gmra.mrb[0].mxu0 %v2215
        %v2264 = vpop.f32.mrb[0].mxu0
        %v2265 = vadd.f32 %v2228, %v2264
        %v2266 = vpop.f32.mrb[0].mxu0
        %v2267 = vpop.f32.mrb[0].mxu0
        %v2268 = vpop.f32.mrb[0].mxu0
        %2269 = vdwg.mxu0
        %2270 = vst [vmem:[%s721] sm:$0xff] %v2265
        %s2271 = sand.u32 %s370, 1
        %s2272 = scalar_lea.sflag [#allocation6], %s2271
        %s2273 = sand.u32 %s370, 1
        %s2274 = smul.addr %s2273, 8
        %s2275 = scalar_lea.vmem [#allocation25], %s2274
        // Predicated region
        $region133: #{tpu_custom_call.1} parent=71 // pred_check
          %p2276 = pneg %p380
        $region134: #{tpu_custom_call.1} parent=71 // pred_check_branch
          %2278 = sbr.rel (%p2276) target = $region136
        $region135: #{tpu_custom_call.1} parent=71 // pred_region
          %s2280 = ssub.s32 128, 128
          %2281 = vsyncadd %s2272, %s2280
          %s2282 = smul.addr %s42, 2
          %s2283 = sadd.s32 %s43, %s2282
          %s2284 = smul.addr %s2283, 128
          %s2285 = scalar_lea.hbm %s13, %s2284
          %s2287 = sshll.u32 %s2275, 4
          %s2288 = int_to_ptr.vmem [resolvable:$true] %s2287
          %2290 = dma.vmem_to_hbm [thread:$0]  %s2288, 128, %s2285, %s2272
        $region136: #{tpu_custom_call.1} parent=71 // pred_fallthru
          _
      $region72: #{tpu_custom_call.1} parent=5 // pred_fallthru
        _
      %p2291 = scmp.le.s32.totalorder 2, %s33
      // Predicated region
      $region137: #{tpu_custom_call.1} parent=5 // pred_check
        %p2292 = pneg %p2291
      $region138: #{tpu_custom_call.1} parent=5 // pred_check_branch
        %2294 = sbr.rel (%p2292) target = $region140
      $region139: #{tpu_custom_call.1} parent=5 // pred_region
        %s2295 = ssub.s32 %s33, 2
        // Predicated region
        $region141: #{tpu_custom_call.1} parent=139 // pred_check
          %p2296 = pneg %p386
        $region142: #{tpu_custom_call.1} parent=139 // pred_check_branch
          %2298 = sbr.rel (%p2296) target = $region144
        $region143: #{tpu_custom_call.1} parent=139 // pred_region
          %s2299 = sand.u32 %s371, 1
          %s2300 = scalar_lea.sflag [#allocation6], %s2299
          %s2301 = sand.u32 %s371, 1
          %s2302 = smul.addr %s2301, 8
          %s2303 = scalar_lea.vmem [#allocation25], %s2302
          %2304 = dma.done %s2300, 128
        $region144: #{tpu_custom_call.1} parent=139 // pred_fallthru
          _
      $region140: #{tpu_custom_call.1} parent=5 // pred_fallthru
        _
    $region6: #{tpu_custom_call.1} parent=1 // loop_footer
      %s37 = sadd.s32 1, %s33
    $region7: #{tpu_custom_call.1} parent=1 // loop_footer_branch
      %32 = sbr.rel target = $region3
    $region8: #{tpu_custom_call.1} parent=1 // loop_exit
      _
    %2305 = vsyncpa [#allocation5], 1
    %s2306 = scalar_lea.sflag [#allocation5], 1
    %2307 = vsyncpa %s2306, 1
    %2308 = vsyncpa [#allocation8], 1
    %s2309 = scalar_lea.sflag [#allocation8], 1
    %2310 = vsyncpa %s2309, 1
    %2311 = vsyncpa [#allocation11], 1
    %2312 = vsyncpa [#allocation14], 1
    %2313 = vsyncpa [#allocation17], 1
    %2314 = vsyncpa [#allocation20], 1
    %2315 = vsyncpa [#allocation23], 1
    %2316 = vsyncpa [#allocation6], 1
    %s2317 = scalar_lea.sflag [#allocation6], 1
    %2318 = vsyncpa %s2317, 1

</llo_original>
